<compile_context>
chip_gen: v7x
topology: tpu7x:2x2x1
jax: 0.10.0
libtpu: 0.0.40
codegen_flags: <defaults>
</compile_context>

<pallas_src>
import functools
import math

import jax
import jax.numpy as jnp
from jax.experimental import pallas as pl
from jax.experimental.pallas import tpu as pltpu

BN_EPS = 1e-5


def _round_up(x, m):
    return (x + m - 1) // m * m


def _tile(dim, target, align):
    """Return (padded_dim, tile) with tile | padded_dim and tile % align == 0."""
    if dim >= target:
        return _round_up(dim, target), target
    padded = _round_up(dim, align)
    return padded, padded


# --------------------------------------------------------------------------
# Kernel 1: fused BatchNorm (inference affine form) + ReLU, element-wise.
# Input rows = N*H*W (sublane axis), columns = channels (lane axis).
# Math in f32; result stored as bf16 for the downstream MXU matmuls.
# --------------------------------------------------------------------------
def _bn_relu_kernel(x_ref, scale_ref, shift_ref, o_ref):
    y = x_ref[...] * scale_ref[...] + shift_ref[...]
    o_ref[...] = jnp.maximum(y, 0.0).astype(o_ref.dtype)


def bn_relu_nhwc(x, scale, shift, out_dtype=jnp.bfloat16):
    """x: (N, H, W, C) f32; scale/shift: (C,) f32 -> (N, H, W, C) out_dtype."""
    n, h, w, c = x.shape
    rows = n * h * w
    cp = _round_up(c, 128)
    rp, tr = _tile(rows, 512, 16)

    xf = jnp.zeros((rp, cp), jnp.float32).at[:rows, :c].set(
        x.reshape(rows, c).astype(jnp.float32))
    scale_p = jnp.zeros((1, cp), jnp.float32).at[0, :c].set(scale)
    shift_p = jnp.zeros((1, cp), jnp.float32).at[0, :c].set(shift)

    out = pl.pallas_call(
        _bn_relu_kernel,
        out_shape=jax.ShapeDtypeStruct((rp, cp), out_dtype),
        grid_spec=pltpu.PrefetchScalarGridSpec(
            num_scalar_prefetch=0,
            grid=(rp // tr,),
            in_specs=[
                pl.BlockSpec((tr, cp), lambda i: (i, 0)),
                pl.BlockSpec((1, cp), lambda i: (0, 0)),
                pl.BlockSpec((1, cp), lambda i: (0, 0)),
            ],
            out_specs=pl.BlockSpec((tr, cp), lambda i: (i, 0)),
        ),
        compiler_params=pltpu.CompilerParams(
            dimension_semantics=("parallel",)),
    )(xf, scale_p, shift_p)
    return out[:rows, :c].reshape(n, h, w, c)


# --------------------------------------------------------------------------
# Kernel 2: M/N/K-tiled matmul, bf16 operands, f32 VMEM accumulator, with a
# fused epilogue: either BN(scale/shift)+ReLU per output channel, or a
# residual add.  Epilogue math in f32, cast at the final store.
# --------------------------------------------------------------------------
def _mm_bn_relu_kernel(a_ref, b_ref, scale_ref, shift_ref, o_ref, acc_ref):
    k = pl.program_id(2)

    @pl.when(k == 0)
    def _():
        acc_ref[...] = jnp.zeros_like(acc_ref)

    acc_ref[...] += jnp.dot(a_ref[...], b_ref[...],
                            preferred_element_type=jnp.float32)

    @pl.when(k == pl.num_programs(2) - 1)
    def _():
        r = acc_ref[...] * scale_ref[...] + shift_ref[...]
        o_ref[...] = jnp.maximum(r, 0.0).astype(o_ref.dtype)


def _mm_residual_kernel(a_ref, b_ref, res_ref, o_ref, acc_ref):
    k = pl.program_id(2)

    @pl.when(k == 0)
    def _():
        acc_ref[...] = jnp.zeros_like(acc_ref)

    acc_ref[...] += jnp.dot(a_ref[...], b_ref[...],
                            preferred_element_type=jnp.float32)

    @pl.when(k == pl.num_programs(2) - 1)
    def _():
        r = acc_ref[...] + res_ref[...].astype(jnp.float32)
        o_ref[...] = r.astype(o_ref.dtype)


def _matmul_fused(a, b, *, epilogue, scale=None, shift=None, residual=None,
                  out_dtype=jnp.float32):
    """a: (M, K), b: (K, N) -> (M, N) with a fused epilogue."""
    m, kdim = a.shape
    kb, ncol = b.shape
    assert kdim == kb
    mp, tm = _tile(m, 256, 16)       # bf16 sublane-friendly (16)
    np_, tn = _tile(ncol, 256, 128)  # 256-wide output tiles when possible
    kp, tk = _tile(kdim, 512, 128)

    a_p = jnp.zeros((mp, kp), jnp.bfloat16).at[:m, :kdim].set(
        a.astype(jnp.bfloat16))
    b_p = jnp.zeros((kp, np_), jnp.bfloat16).at[:kdim, :ncol].set(
        b.astype(jnp.bfloat16))

    grid = (mp // tm, np_ // tn, kp // tk)
    a_spec = pl.BlockSpec((tm, tk), lambda i, j, k: (i, k))
    b_spec = pl.BlockSpec((tk, tn), lambda i, j, k: (k, j))
    o_spec = pl.BlockSpec((tm, tn), lambda i, j, k: (i, j))
    scratch = [pltpu.VMEM((tm, tn), jnp.float32)]
    cparams = pltpu.CompilerParams(
        dimension_semantics=("parallel", "parallel", "arbitrary"))

    if epilogue == "bn_relu":
        scale_p = jnp.zeros((1, np_), jnp.float32).at[0, :ncol].set(scale)
        shift_p = jnp.zeros((1, np_), jnp.float32).at[0, :ncol].set(shift)
        vec_spec = pl.BlockSpec((1, tn), lambda i, j, k: (0, j))
        out = pl.pallas_call(
            _mm_bn_relu_kernel,
            out_shape=jax.ShapeDtypeStruct((mp, np_), out_dtype),
            grid_spec=pltpu.PrefetchScalarGridSpec(
                num_scalar_prefetch=0, grid=grid,
                in_specs=[a_spec, b_spec, vec_spec, vec_spec],
                out_specs=o_spec, scratch_shapes=scratch),
            compiler_params=cparams,
        )(a_p, b_p, scale_p, shift_p)
    elif epilogue == "residual":
        res_p = jnp.zeros((mp, np_), jnp.float32).at[:m, :ncol].set(
            residual.astype(jnp.float32))
        r_spec = pl.BlockSpec((tm, tn), lambda i, j, k: (i, j))
        out = pl.pallas_call(
            _mm_residual_kernel,
            out_shape=jax.ShapeDtypeStruct((mp, np_), out_dtype),
            grid_spec=pltpu.PrefetchScalarGridSpec(
                num_scalar_prefetch=0, grid=grid,
                in_specs=[a_spec, b_spec, r_spec],
                out_specs=o_spec, scratch_shapes=scratch),
            compiler_params=cparams,
        )(a_p, b_p, res_p)
    else:
        raise ValueError(f"unknown epilogue: {epilogue}")
    return out[:m, :ncol]


# --------------------------------------------------------------------------
# 3x3 conv (padding=1, no bias) = NHWC im2col + fused matmul.
# --------------------------------------------------------------------------
def _im2col_3x3(a, stride):
    """a: (N, H, W, C) -> (N*Ho*Wo, 9*C), plus output spatial dims."""
    n, h, w, c = a.shape
    ap = jnp.pad(a, ((0, 0), (1, 1), (1, 1), (0, 0)))
    ho = (h + 2 - 3) // stride + 1
    wo = (w + 2 - 3) // stride + 1
    patches = []
    for di in range(3):
        for dj in range(3):
            patches.append(
                ap[:, di:di + stride * ho:stride, dj:dj + stride * wo:stride, :])
    cols = jnp.concatenate(patches, axis=-1)       # (N, Ho, Wo, 9*C)
    return cols.reshape(n * ho * wo, 9 * c), ho, wo


def conv3x3_fused(a, w, stride, *, epilogue, scale=None, shift=None,
                  residual=None, out_dtype=jnp.float32):
    """a: (N, H, W, Cin) NHWC; w: (Cout, Cin, 3, 3) torch layout."""
    n, h, wdim, cin = a.shape
    cout = w.shape[0]
    assert w.shape[1] == cin
    cols, ho, wo = _im2col_3x3(a, stride)
    wmat = jnp.transpose(w, (2, 3, 1, 0)).reshape(9 * cin, cout)
    out = _matmul_fused(cols, wmat, epilogue=epilogue, scale=scale,
                        shift=shift, residual=residual, out_dtype=out_dtype)
    return out.reshape(n, ho, wo, cout)


# --------------------------------------------------------------------------
# BasicBlock forward.
# --------------------------------------------------------------------------
def basic_block_forward(params, x, *, stride=1):
    g1, b1, m1, v1 = params["bn1"]
    g2, b2, m2, v2 = params["bn2"]
    scale1 = g1 * jax.lax.rsqrt(v1 + BN_EPS)
    shift1 = b1 - m1 * scale1
    scale2 = g2 * jax.lax.rsqrt(v2 + BN_EPS)
    shift2 = b2 - m2 * scale2

    x_nhwc = jnp.transpose(x, (0, 2, 3, 1))        # NCHW -> NHWC once

    a1 = bn_relu_nhwc(x_nhwc, scale1, shift1)      # relu(bn1(x)), bf16
    h1 = conv3x3_fused(a1, params["conv1"], stride,
                       epilogue="bn_relu", scale=scale2, shift=shift2,
                       out_dtype=jnp.bfloat16)     # relu(bn2(conv1(.))), bf16

    # Identity residual (downsample=None): needs stride==1, inplanes==planes.
    n, ho, wo, planes = h1.shape
    assert x_nhwc.shape[1:3] == (ho, wo) and x_nhwc.shape[3] == planes, (
        "identity residual requires stride=1 and inplanes==planes "
        "(downsample path not implemented)")
    residual = x_nhwc.reshape(n * ho * wo, planes)

    out = conv3x3_fused(h1, params["conv2"], 1,
                        epilogue="residual", residual=residual,
                        out_dtype=jnp.float32)     # conv2(.) + residual
    return jnp.transpose(out, (0, 3, 1, 2))        # NHWC -> NCHW


# --------------------------------------------------------------------------
# Parameters and reference.
# --------------------------------------------------------------------------
def init_params(key, inplanes, planes):
    ks = jax.random.split(key, 10)
    w1 = jax.random.normal(ks[0], (planes, inplanes, 3, 3),
                           jnp.float32) / math.sqrt(9 * inplanes)
    w2 = jax.random.normal(ks[1], (planes, planes, 3, 3),
                           jnp.float32) / math.sqrt(9 * planes)
    bn1 = (1.0 + 0.1 * jax.random.normal(ks[2], (inplanes,), jnp.float32),
           0.1 * jax.random.normal(ks[3], (inplanes,), jnp.float32),
           0.1 * jax.random.normal(ks[4], (inplanes,), jnp.float32),
           0.5 + jax.random.uniform(ks[5], (inplanes,), jnp.float32))
    bn2 = (1.0 + 0.1 * jax.random.normal(ks[6], (planes,), jnp.float32),
           0.1 * jax.random.normal(ks[7], (planes,), jnp.float32),
           0.1 * jax.random.normal(ks[8], (planes,), jnp.float32),
           0.5 + jax.random.uniform(ks[9], (planes,), jnp.float32))
    return {"conv1": w1, "conv2": w2, "bn1": bn1, "bn2": bn2}


def _reference_forward(params, x, *, stride=1):
    def bn(t, g, b, m, v):
        s = g / jnp.sqrt(v + BN_EPS)
        return t * s[None, :, None, None] + (b - m * s)[None, :, None, None]

    def conv(t, w, s):
        return jax.lax.conv_general_dilated(
            t, w, (s, s), ((1, 1), (1, 1)),
            dimension_numbers=("NCHW", "OIHW", "NCHW"),
            precision=jax.lax.Precision.HIGHEST)

    out = jnp.maximum(bn(x, *params["bn1"]), 0.0)
    out = conv(out, params["conv1"], stride)
    out = jnp.maximum(bn(out, *params["bn2"]), 0.0)
    out = conv(out, params["conv2"], 1)
    return out + x


if __name__ == "__main__":
    key = jax.random.PRNGKey(0)
    k_param, k_x = jax.random.split(key)
    inplanes = planes = 16
    n, h, w = 2, 16, 16

    params = init_params(k_param, inplanes, planes)
    x = jax.random.normal(k_x, (n, inplanes, h, w), jnp.float32)

    fwd = jax.jit(functools.partial(basic_block_forward, stride=1))
    out = jax.block_until_ready(fwd(params, x))

    assert out.shape == (n, planes, h, w), out.shape
    assert bool(jnp.all(jnp.isfinite(out)))

    # Tolerance check vs. pure-XLA f32 reference (kernel uses bf16 MXU
    # operands with f32 accumulation, so expect small numeric differences).
    ref = _reference_forward(params, x, stride=1)
    max_err = float(jnp.max(jnp.abs(out - ref)))
    tol = 1e-1 + 1e-1 * float(jnp.max(jnp.abs(ref)))
    assert max_err < tol, (max_err, tol)

    print("KERNEL_OK")
</pallas_src>

<mosaic_0001>
module attributes {stable_mosaic.version = 11 : i64} {
  func.func @_bn_relu_kernel(%arg0: i32, %arg1: memref<512x128xf32, #tpu.memory_space<vmem>>, %arg2: memref<1x128xf32, #tpu.memory_space<vmem>>, %arg3: memref<1x128xf32, #tpu.memory_space<vmem>>, %arg4: memref<512x128xbf16, #tpu.memory_space<vmem>>) attributes {dimension_semantics = [#tpu.dimension_semantics<parallel>], iteration_bounds = array<i64: 1>, scalar_prefetch = 0 : i64, scratch_operands = 0 : i64, tpu.core_type = #tpu.core_type<tc>, window_params = [{transform_indices = @transform_0, window_bounds = array<i64: 512, 128>}, {pipeline_mode = #tpu.pipeline_mode<synchronous>, transform_indices = @transform_1, window_bounds = array<i64: 1, 128>}, {pipeline_mode = #tpu.pipeline_mode<synchronous>, transform_indices = @transform_2, window_bounds = array<i64: 1, 128>}, {transform_indices = @transform_3, window_bounds = array<i64: 512, 128>}]} {
    %c0 = arith.constant 0 : index
    %c0_0 = arith.constant 0 : index
    %0 = vector.load %arg1[%c0, %c0_0] : memref<512x128xf32, #tpu.memory_space<vmem>>, vector<512x128xf32>
    %c0_1 = arith.constant 0 : index
    %c0_2 = arith.constant 0 : index
    %1 = vector.load %arg2[%c0_1, %c0_2] : memref<1x128xf32, #tpu.memory_space<vmem>>, vector<1x128xf32>
    %2 = vector.broadcast %1 : vector<1x128xf32> to vector<512x128xf32>
    %3 = arith.mulf %0, %2 : vector<512x128xf32>
    %c0_3 = arith.constant 0 : index
    %c0_4 = arith.constant 0 : index
    %4 = vector.load %arg3[%c0_3, %c0_4] : memref<1x128xf32, #tpu.memory_space<vmem>>, vector<1x128xf32>
    %5 = vector.broadcast %4 : vector<1x128xf32> to vector<512x128xf32>
    %6 = arith.addf %3, %5 : vector<512x128xf32>
    %cst = arith.constant 0.000000e+00 : f32
    %7 = vector.broadcast %cst : f32 to vector<512x128xf32>
    %8 = arith.maximumf %6, %7 : vector<512x128xf32>
    %9 = arith.truncf %8 : vector<512x128xf32> to vector<512x128xbf16>
    %c0_5 = arith.constant 0 : index
    %c0_6 = arith.constant 0 : index
    %10 = vector.load %arg4[%c0_5, %c0_6] : memref<512x128xbf16, #tpu.memory_space<vmem>>, vector<512x128xbf16>
    tpu.vector_store %arg4[%c0_5, %c0_6], %9 {strides = array<i32>} : memref<512x128xbf16, #tpu.memory_space<vmem>>, vector<512x128xbf16>,
    return
  }
  func.func @transform_0(%arg0: i32) -> (i32, i32) {
    %c0_i32 = arith.constant 0 : i32
    %c0_i32_0 = arith.constant 0 : i32
    return %arg0, %c0_i32 : i32, i32
  }
  func.func @transform_1(%arg0: i32) -> (i32, i32) {
    %c0_i32 = arith.constant 0 : i32
    %c0_i32_0 = arith.constant 0 : i32
    %c0_i32_1 = arith.constant 0 : i32
    return %c0_i32, %c0_i32_0 : i32, i32
  }
  func.func @transform_2(%arg0: i32) -> (i32, i32) {
    %c0_i32 = arith.constant 0 : i32
    %c0_i32_0 = arith.constant 0 : i32
    %c0_i32_1 = arith.constant 0 : i32
    return %c0_i32, %c0_i32_0 : i32, i32
  }
  func.func @transform_3(%arg0: i32) -> (i32, i32) {
    %c0_i32 = arith.constant 0 : i32
    %c0_i32_0 = arith.constant 0 : i32
    return %arg0, %c0_i32 : i32, i32
  }
}

module attributes {stable_mosaic.version = 11 : i64} {
  func.func @_mm_bn_relu_kernel(%arg0: i32, %arg1: i32, %arg2: i32, %arg3: memref<256x256xbf16, #tpu.memory_space<vmem>>, %arg4: memref<256x128xbf16, #tpu.memory_space<vmem>>, %arg5: memref<1x128xf32, #tpu.memory_space<vmem>>, %arg6: memref<1x128xf32, #tpu.memory_space<vmem>>, %arg7: memref<256x128xbf16, #tpu.memory_space<vmem>>, %arg8: memref<256x128xf32, #tpu.memory_space<vmem>>) attributes {dimension_semantics = [#tpu.dimension_semantics<parallel>, #tpu.dimension_semantics<parallel>, #tpu.dimension_semantics<arbitrary>], iteration_bounds = array<i64: 2, 1, 1>, scalar_prefetch = 0 : i64, scratch_operands = 1 : i64, tpu.core_type = #tpu.core_type<tc>, window_params = [{transform_indices = @transform_0, window_bounds = array<i64: 256, 256>}, {transform_indices = @transform_1, window_bounds = array<i64: 256, 128>}, {transform_indices = @transform_2, window_bounds = array<i64: 1, 128>}, {transform_indices = @transform_3, window_bounds = array<i64: 1, 128>}, {transform_indices = @transform_4, window_bounds = array<i64: 256, 128>}]} {
    %c0_i32 = arith.constant 0 : i32
    %0 = arith.cmpi eq, %arg2, %c0_i32 : i32
    %1 = arith.extui %0 : i1 to i32
    %c0_i32_0 = arith.constant 0 : i32
    %2 = arith.cmpi ne, %1, %c0_i32_0 : i32
    scf.if %2 {
      %cst_10 = arith.constant 0.000000e+00 : f32
      %12 = vector.broadcast %cst_10 : f32 to vector<256x128xf32>
      %c0_11 = arith.constant 0 : index
      %c0_12 = arith.constant 0 : index
      %13 = vector.load %arg8[%c0_11, %c0_12] : memref<256x128xf32, #tpu.memory_space<vmem>>, vector<256x128xf32>
      tpu.vector_store %arg8[%c0_11, %c0_12], %12 {strides = array<i32>} : memref<256x128xf32, #tpu.memory_space<vmem>>, vector<256x128xf32>,
    } else {
    }
    %c0 = arith.constant 0 : index
    %c0_1 = arith.constant 0 : index
    %3 = vector.load %arg8[%c0, %c0_1] : memref<256x128xf32, #tpu.memory_space<vmem>>, vector<256x128xf32>
    %c0_2 = arith.constant 0 : index
    %c0_3 = arith.constant 0 : index
    %4 = vector.load %arg3[%c0_2, %c0_3] : memref<256x256xbf16, #tpu.memory_space<vmem>>, vector<256x256xbf16>
    %c0_4 = arith.constant 0 : index
    %c0_5 = arith.constant 0 : index
    %5 = vector.load %arg4[%c0_4, %c0_5] : memref<256x128xbf16, #tpu.memory_space<vmem>>, vector<256x128xbf16>
    %cst = arith.constant dense<0.000000e+00> : vector<256x128xf32>
    %6 = tpu.matmul %4, %5, %cst {dimension_numbers = #tpu.dot_dimension_numbers<[1], [0], [0], [1], [0, 0, 1, 1], [], []>} : vector<256x256xbf16>, vector<256x128xbf16>, vector<256x128xf32> -> vector<256x128xf32>
    %7 = arith.addf %3, %6 : vector<256x128xf32>
    %c0_6 = arith.constant 0 : index
    %c0_7 = arith.constant 0 : index
    %8 = vector.load %arg8[%c0_6, %c0_7] : memref<256x128xf32, #tpu.memory_space<vmem>>, vector<256x128xf32>
    tpu.vector_store %arg8[%c0_6, %c0_7], %7 {strides = array<i32>} : memref<256x128xf32, #tpu.memory_space<vmem>>, vector<256x128xf32>,
    %c0_i32_8 = arith.constant 0 : i32
    %9 = arith.cmpi eq, %arg2, %c0_i32_8 : i32
    %10 = arith.extui %9 : i1 to i32
    %c0_i32_9 = arith.constant 0 : i32
    %11 = arith.cmpi ne, %10, %c0_i32_9 : i32
    scf.if %11 {
      %c0_10 = arith.constant 0 : index
      %c0_11 = arith.constant 0 : index
      %12 = vector.load %arg8[%c0_10, %c0_11] : memref<256x128xf32, #tpu.memory_space<vmem>>, vector<256x128xf32>
      %c0_12 = arith.constant 0 : index
      %c0_13 = arith.constant 0 : index
      %13 = vector.load %arg5[%c0_12, %c0_13] : memref<1x128xf32, #tpu.memory_space<vmem>>, vector<1x128xf32>
      %14 = vector.broadcast %13 : vector<1x128xf32> to vector<256x128xf32>
      %15 = arith.mulf %12, %14 : vector<256x128xf32>
      %c0_14 = arith.constant 0 : index
      %c0_15 = arith.constant 0 : index
      %16 = vector.load %arg6[%c0_14, %c0_15] : memref<1x128xf32, #tpu.memory_space<vmem>>, vector<1x128xf32>
      %17 = vector.broadcast %16 : vector<1x128xf32> to vector<256x128xf32>
      %18 = arith.addf %15, %17 : vector<256x128xf32>
      %cst_16 = arith.constant 0.000000e+00 : f32
      %19 = vector.broadcast %cst_16 : f32 to vector<256x128xf32>
      %20 = arith.maximumf %18, %19 : vector<256x128xf32>
      %21 = arith.truncf %20 : vector<256x128xf32> to vector<256x128xbf16>
      %c0_17 = arith.constant 0 : index
      %c0_18 = arith.constant 0 : index
      %22 = vector.load %arg7[%c0_17, %c0_18] : memref<256x128xbf16, #tpu.memory_space<vmem>>, vector<256x128xbf16>
      tpu.vector_store %arg7[%c0_17, %c0_18], %21 {strides = array<i32>} : memref<256x128xbf16, #tpu.memory_space<vmem>>, vector<256x128xbf16>,
    } else {
    }
    return
  }
  func.func @transform_0(%arg0: i32, %arg1: i32, %arg2: i32) -> (i32, i32) {
    %c0_i32 = arith.constant 0 : i32
    return %arg0, %arg2 : i32, i32
  }
  func.func @transform_1(%arg0: i32, %arg1: i32, %arg2: i32) -> (i32, i32) {
    %c0_i32 = arith.constant 0 : i32
    return %arg2, %arg1 : i32, i32
  }
  func.func @transform_2(%arg0: i32, %arg1: i32, %arg2: i32) -> (i32, i32) {
    %c0_i32 = arith.constant 0 : i32
    %c0_i32_0 = arith.constant 0 : i32
    return %c0_i32, %arg1 : i32, i32
  }
  func.func @transform_3(%arg0: i32, %arg1: i32, %arg2: i32) -> (i32, i32) {
    %c0_i32 = arith.constant 0 : i32
    %c0_i32_0 = arith.constant 0 : i32
    return %c0_i32, %arg1 : i32, i32
  }
  func.func @transform_4(%arg0: i32, %arg1: i32, %arg2: i32) -> (i32, i32) {
    %c0_i32 = arith.constant 0 : i32
    return %arg0, %arg1 : i32, i32
  }
}

module attributes {stable_mosaic.version = 11 : i64} {
  func.func @_mm_residual_kernel(%arg0: i32, %arg1: i32, %arg2: i32, %arg3: memref<256x256xbf16, #tpu.memory_space<vmem>>, %arg4: memref<256x128xbf16, #tpu.memory_space<vmem>>, %arg5: memref<256x128xf32, #tpu.memory_space<vmem>>, %arg6: memref<256x128xf32, #tpu.memory_space<vmem>>, %arg7: memref<256x128xf32, #tpu.memory_space<vmem>>) attributes {dimension_semantics = [#tpu.dimension_semantics<parallel>, #tpu.dimension_semantics<parallel>, #tpu.dimension_semantics<arbitrary>], iteration_bounds = array<i64: 2, 1, 1>, scalar_prefetch = 0 : i64, scratch_operands = 1 : i64, tpu.core_type = #tpu.core_type<tc>, window_params = [{transform_indices = @transform_0, window_bounds = array<i64: 256, 256>}, {transform_indices = @transform_1, window_bounds = array<i64: 256, 128>}, {transform_indices = @transform_2, window_bounds = array<i64: 256, 128>}, {transform_indices = @transform_3, window_bounds = array<i64: 256, 128>}]} {
    %c0_i32 = arith.constant 0 : i32
    %0 = arith.cmpi eq, %arg2, %c0_i32 : i32
    %1 = arith.extui %0 : i1 to i32
    %c0_i32_0 = arith.constant 0 : i32
    %2 = arith.cmpi ne, %1, %c0_i32_0 : i32
    scf.if %2 {
      %cst_10 = arith.constant 0.000000e+00 : f32
      %12 = vector.broadcast %cst_10 : f32 to vector<256x128xf32>
      %c0_11 = arith.constant 0 : index
      %c0_12 = arith.constant 0 : index
      %13 = vector.load %arg7[%c0_11, %c0_12] : memref<256x128xf32, #tpu.memory_space<vmem>>, vector<256x128xf32>
      tpu.vector_store %arg7[%c0_11, %c0_12], %12 {strides = array<i32>} : memref<256x128xf32, #tpu.memory_space<vmem>>, vector<256x128xf32>,
    } else {
    }
    %c0 = arith.constant 0 : index
    %c0_1 = arith.constant 0 : index
    %3 = vector.load %arg7[%c0, %c0_1] : memref<256x128xf32, #tpu.memory_space<vmem>>, vector<256x128xf32>
    %c0_2 = arith.constant 0 : index
    %c0_3 = arith.constant 0 : index
    %4 = vector.load %arg3[%c0_2, %c0_3] : memref<256x256xbf16, #tpu.memory_space<vmem>>, vector<256x256xbf16>
    %c0_4 = arith.constant 0 : index
    %c0_5 = arith.constant 0 : index
    %5 = vector.load %arg4[%c0_4, %c0_5] : memref<256x128xbf16, #tpu.memory_space<vmem>>, vector<256x128xbf16>
    %cst = arith.constant dense<0.000000e+00> : vector<256x128xf32>
    %6 = tpu.matmul %4, %5, %cst {dimension_numbers = #tpu.dot_dimension_numbers<[1], [0], [0], [1], [0, 0, 1, 1], [], []>} : vector<256x256xbf16>, vector<256x128xbf16>, vector<256x128xf32> -> vector<256x128xf32>
    %7 = arith.addf %3, %6 : vector<256x128xf32>
    %c0_6 = arith.constant 0 : index
    %c0_7 = arith.constant 0 : index
    %8 = vector.load %arg7[%c0_6, %c0_7] : memref<256x128xf32, #tpu.memory_space<vmem>>, vector<256x128xf32>
    tpu.vector_store %arg7[%c0_6, %c0_7], %7 {strides = array<i32>} : memref<256x128xf32, #tpu.memory_space<vmem>>, vector<256x128xf32>,
    %c0_i32_8 = arith.constant 0 : i32
    %9 = arith.cmpi eq, %arg2, %c0_i32_8 : i32
    %10 = arith.extui %9 : i1 to i32
    %c0_i32_9 = arith.constant 0 : i32
    %11 = arith.cmpi ne, %10, %c0_i32_9 : i32
    scf.if %11 {
      %c0_10 = arith.constant 0 : index
      %c0_11 = arith.constant 0 : index
      %12 = vector.load %arg7[%c0_10, %c0_11] : memref<256x128xf32, #tpu.memory_space<vmem>>, vector<256x128xf32>
      %c0_12 = arith.constant 0 : index
      %c0_13 = arith.constant 0 : index
      %13 = vector.load %arg5[%c0_12, %c0_13] : memref<256x128xf32, #tpu.memory_space<vmem>>, vector<256x128xf32>
      %14 = arith.addf %12, %13 : vector<256x128xf32>
      %c0_14 = arith.constant 0 : index
      %c0_15 = arith.constant 0 : index
      %15 = vector.load %arg6[%c0_14, %c0_15] : memref<256x128xf32, #tpu.memory_space<vmem>>, vector<256x128xf32>
      tpu.vector_store %arg6[%c0_14, %c0_15], %14 {strides = array<i32>} : memref<256x128xf32, #tpu.memory_space<vmem>>, vector<256x128xf32>,
    } else {
    }
    return
  }
  func.func @transform_0(%arg0: i32, %arg1: i32, %arg2: i32) -> (i32, i32) {
    %c0_i32 = arith.constant 0 : i32
    return %arg0, %arg2 : i32, i32
  }
  func.func @transform_1(%arg0: i32, %arg1: i32, %arg2: i32) -> (i32, i32) {
    %c0_i32 = arith.constant 0 : i32
    return %arg2, %arg1 : i32, i32
  }
  func.func @transform_2(%arg0: i32, %arg1: i32, %arg2: i32) -> (i32, i32) {
    %c0_i32 = arith.constant 0 : i32
    return %arg0, %arg1 : i32, i32
  }
  func.func @transform_3(%arg0: i32, %arg1: i32, %arg2: i32) -> (i32, i32) {
    %c0_i32 = arith.constant 0 : i32
    return %arg0, %arg1 : i32, i32
  }
}

</mosaic_0001>

<llo_original>
// kernel: basic_block_forward.3
$region0: #{basic_block_forward.3}
  #allocation0 [shape = 'u32[]', space=smem, size = 0x4, offset = 0x4, fixed_abs, tag = 'smem constant byte address 0x4 - core index']
  #allocation1 [shape = 'u32[144,128]{1,0:T(1,128)}', space=vmem, size = 0x12000, scoped, tag = 'internal scratch']
  %s0 = inlined_call_operand.vmem [shape: f32[512,128], index: 0, kind: input, shape index: {}]
  %s1 = inlined_call_operand.vmem [shape: f32[1,128], index: 1, kind: input, shape index: {}]
  %s2 = inlined_call_operand.vmem [shape: f32[1,128], index: 2, kind: input, shape index: {}]
  %s3 = inlined_call_operand.vmem [shape: bf16[512,128], index: 3, kind: output, shape index: {}]
  %s4 = sld [smem:[#allocation0]]
  $region22: #{basic_block_forward.3} parent=0
    _
  %s6 = ssub.s32 1, %s4
  %s7 = scalar_select 0, %s6, %s4
  // Predicated region
  $region2: #{basic_block_forward.3} parent=0 // pred_check
    _
  $region3: #{basic_block_forward.3} parent=0 // pred_check_branch
    %9 = sbr.rel (0) target = $region5
  $region4: #{basic_block_forward.3} parent=0 // pred_region
    _
  $region5: #{basic_block_forward.3} parent=0 // pred_fallthru
    _
  // Predicated region
  $region6: #{basic_block_forward.3} parent=0 // pred_check
    _
  $region7: #{basic_block_forward.3} parent=0 // pred_check_branch
    %11 = sbr.rel (0) target = $region9
  $region8: #{basic_block_forward.3} parent=0 // pred_region
    _
  $region9: #{basic_block_forward.3} parent=0 // pred_fallthru
    _
  // Predicated region
  $region10: #{basic_block_forward.3} parent=0 // pred_check
    _
  $region11: #{basic_block_forward.3} parent=0 // pred_check_branch
    %13 = sbr.rel (0) target = $region13
  $region12: #{basic_block_forward.3} parent=0 // pred_region
    _
  $region13: #{basic_block_forward.3} parent=0 // pred_fallthru
    _
  %v14 = vld [vmem:[%s0] sm:$0xff]
  %v15 = vld [vmem:[%s0 + $0x8] sm:$0xff]
  %v16 = vld [vmem:[%s0 + $0x10] sm:$0xff]
  %v17 = vld [vmem:[%s0 + $0x18] sm:$0xff]
  %v18 = vld [vmem:[%s0 + $0x20] sm:$0xff]
  %v19 = vld [vmem:[%s0 + $0x28] sm:$0xff]
  %v20 = vld [vmem:[%s0 + $0x30] sm:$0xff]
  %v21 = vld [vmem:[%s0 + $0x38] sm:$0xff]
  %v22 = vld [vmem:[%s0 + $0x40] sm:$0xff]
  %v23 = vld [vmem:[%s0 + $0x48] sm:$0xff]
  %v24 = vld [vmem:[%s0 + $0x50] sm:$0xff]
  %v25 = vld [vmem:[%s0 + $0x58] sm:$0xff]
  %v26 = vld [vmem:[%s0 + $0x60] sm:$0xff]
  %v27 = vld [vmem:[%s0 + $0x68] sm:$0xff]
  %v28 = vld [vmem:[%s0 + $0x70] sm:$0xff]
  %v29 = vld [vmem:[%s0 + $0x78] sm:$0xff]
  %v30 = vld [vmem:[%s0 + $0x80] sm:$0xff]
  %v31 = vld [vmem:[%s0 + $0x88] sm:$0xff]
  %v32 = vld [vmem:[%s0 + $0x90] sm:$0xff]
  %v33 = vld [vmem:[%s0 + $0x98] sm:$0xff]
  %v34 = vld [vmem:[%s0 + $0xa0] sm:$0xff]
  %v35 = vld [vmem:[%s0 + $0xa8] sm:$0xff]
  %v36 = vld [vmem:[%s0 + $0xb0] sm:$0xff]
  %v37 = vld [vmem:[%s0 + $0xb8] sm:$0xff]
  %v38 = vld [vmem:[%s0 + $0xc0] sm:$0xff]
  %v39 = vld [vmem:[%s0 + $0xc8] sm:$0xff]
  %v40 = vld [vmem:[%s0 + $0xd0] sm:$0xff]
  %v41 = vld [vmem:[%s0 + $0xd8] sm:$0xff]
  %v42 = vld [vmem:[%s0 + $0xe0] sm:$0xff]
  %v43 = vld [vmem:[%s0 + $0xe8] sm:$0xff]
  %v44 = vld [vmem:[%s0 + $0xf0] sm:$0xff]
  %v45 = vld [vmem:[%s0 + $0xf8] sm:$0xff]
  %v46 = vld [vmem:[%s0 + $0x100] sm:$0xff]
  %v47 = vld [vmem:[%s0 + $0x108] sm:$0xff]
  %v48 = vld [vmem:[%s0 + $0x110] sm:$0xff]
  %v49 = vld [vmem:[%s0 + $0x118] sm:$0xff]
  %v50 = vld [vmem:[%s0 + $0x120] sm:$0xff]
  %v51 = vld [vmem:[%s0 + $0x128] sm:$0xff]
  %v52 = vld [vmem:[%s0 + $0x130] sm:$0xff]
  %v53 = vld [vmem:[%s0 + $0x138] sm:$0xff]
  %v54 = vld [vmem:[%s0 + $0x140] sm:$0xff]
  %v55 = vld [vmem:[%s0 + $0x148] sm:$0xff]
  %v56 = vld [vmem:[%s0 + $0x150] sm:$0xff]
  %v57 = vld [vmem:[%s0 + $0x158] sm:$0xff]
  %v58 = vld [vmem:[%s0 + $0x160] sm:$0xff]
  %v59 = vld [vmem:[%s0 + $0x168] sm:$0xff]
  %v60 = vld [vmem:[%s0 + $0x170] sm:$0xff]
  %v61 = vld [vmem:[%s0 + $0x178] sm:$0xff]
  %v62 = vld [vmem:[%s0 + $0x180] sm:$0xff]
  %v63 = vld [vmem:[%s0 + $0x188] sm:$0xff]
  %v64 = vld [vmem:[%s0 + $0x190] sm:$0xff]
  %v65 = vld [vmem:[%s0 + $0x198] sm:$0xff]
  %v66 = vld [vmem:[%s0 + $0x1a0] sm:$0xff]
  %v67 = vld [vmem:[%s0 + $0x1a8] sm:$0xff]
  %v68 = vld [vmem:[%s0 + $0x1b0] sm:$0xff]
  %v69 = vld [vmem:[%s0 + $0x1b8] sm:$0xff]
  %v70 = vld [vmem:[%s0 + $0x1c0] sm:$0xff]
  %v71 = vld [vmem:[%s0 + $0x1c8] sm:$0xff]
  %v72 = vld [vmem:[%s0 + $0x1d0] sm:$0xff]
  %v73 = vld [vmem:[%s0 + $0x1d8] sm:$0xff]
  %v74 = vld [vmem:[%s0 + $0x1e0] sm:$0xff]
  %v75 = vld [vmem:[%s0 + $0x1e8] sm:$0xff]
  %v76 = vld [vmem:[%s0 + $0x1f0] sm:$0xff]
  %v77 = vld [vmem:[%s0 + $0x1f8] sm:$0xff]
  %v78 = vld [vmem:[%s1] sm:$0x1]
  %v80 = vlaneseq
  %v81 = vshrl.u32 %v80, 7
  %v82 = vsub.s32 0, %v81
  %v83 = vrot.slane %v78, %v82
  %v85 = vmul.f32 %v14, %v83
  %v86 = vmul.f32 %v15, %v83
  %v87 = vmul.f32 %v16, %v83
  %v88 = vmul.f32 %v17, %v83
  %v89 = vmul.f32 %v18, %v83
  %v90 = vmul.f32 %v19, %v83
  %v91 = vmul.f32 %v20, %v83
  %v92 = vmul.f32 %v21, %v83
  %v93 = vmul.f32 %v22, %v83
  %v94 = vmul.f32 %v23, %v83
  %v95 = vmul.f32 %v24, %v83
  %v96 = vmul.f32 %v25, %v83
  %v97 = vmul.f32 %v26, %v83
  %v98 = vmul.f32 %v27, %v83
  %v99 = vmul.f32 %v28, %v83
  %v100 = vmul.f32 %v29, %v83
  %v101 = vmul.f32 %v30, %v83
  %v102 = vmul.f32 %v31, %v83
  %v103 = vmul.f32 %v32, %v83
  %v104 = vmul.f32 %v33, %v83
  %v105 = vmul.f32 %v34, %v83
  %v106 = vmul.f32 %v35, %v83
  %v107 = vmul.f32 %v36, %v83
  %v108 = vmul.f32 %v37, %v83
  %v109 = vmul.f32 %v38, %v83
  %v110 = vmul.f32 %v39, %v83
  %v111 = vmul.f32 %v40, %v83
  %v112 = vmul.f32 %v41, %v83
  %v113 = vmul.f32 %v42, %v83
  %v114 = vmul.f32 %v43, %v83
  %v115 = vmul.f32 %v44, %v83
  %v116 = vmul.f32 %v45, %v83
  %v117 = vmul.f32 %v46, %v83
  %v118 = vmul.f32 %v47, %v83
  %v119 = vmul.f32 %v48, %v83
  %v120 = vmul.f32 %v49, %v83
  %v121 = vmul.f32 %v50, %v83
  %v122 = vmul.f32 %v51, %v83
  %v123 = vmul.f32 %v52, %v83
  %v124 = vmul.f32 %v53, %v83
  %v125 = vmul.f32 %v54, %v83
  %v126 = vmul.f32 %v55, %v83
  %v127 = vmul.f32 %v56, %v83
  %v128 = vmul.f32 %v57, %v83
  %v129 = vmul.f32 %v58, %v83
  %v130 = vmul.f32 %v59, %v83
  %v131 = vmul.f32 %v60, %v83
  %v132 = vmul.f32 %v61, %v83
  %v133 = vmul.f32 %v62, %v83
  %v134 = vmul.f32 %v63, %v83
  %v135 = vmul.f32 %v64, %v83
  %v136 = vmul.f32 %v65, %v83
  %v137 = vmul.f32 %v66, %v83
  %v138 = vmul.f32 %v67, %v83
  %v139 = vmul.f32 %v68, %v83
  %v140 = vmul.f32 %v69, %v83
  %v141 = vmul.f32 %v70, %v83
  %v142 = vmul.f32 %v71, %v83
  %v143 = vmul.f32 %v72, %v83
  %v144 = vmul.f32 %v73, %v83
  %v145 = vmul.f32 %v74, %v83
  %v146 = vmul.f32 %v75, %v83
  %v147 = vmul.f32 %v76, %v83
  %v148 = vmul.f32 %v77, %v83
  %v149 = vld [vmem:[%s2] sm:$0x1]
  %v151 = vlaneseq
  %v152 = vshrl.u32 %v151, 7
  %v153 = vsub.s32 0, %v152
  %v154 = vrot.slane %v149, %v153
  %v156 = vadd.f32 %v85, %v154
  %v157 = vadd.f32 %v86, %v154
  %v158 = vadd.f32 %v87, %v154
  %v159 = vadd.f32 %v88, %v154
  %v160 = vadd.f32 %v89, %v154
  %v161 = vadd.f32 %v90, %v154
  %v162 = vadd.f32 %v91, %v154
  %v163 = vadd.f32 %v92, %v154
  %v164 = vadd.f32 %v93, %v154
  %v165 = vadd.f32 %v94, %v154
  %v166 = vadd.f32 %v95, %v154
  %v167 = vadd.f32 %v96, %v154
  %v168 = vadd.f32 %v97, %v154
  %v169 = vadd.f32 %v98, %v154
  %v170 = vadd.f32 %v99, %v154
  %v171 = vadd.f32 %v100, %v154
  %v172 = vadd.f32 %v101, %v154
  %v173 = vadd.f32 %v102, %v154
  %v174 = vadd.f32 %v103, %v154
  %v175 = vadd.f32 %v104, %v154
  %v176 = vadd.f32 %v105, %v154
  %v177 = vadd.f32 %v106, %v154
  %v178 = vadd.f32 %v107, %v154
  %v179 = vadd.f32 %v108, %v154
  %v180 = vadd.f32 %v109, %v154
  %v181 = vadd.f32 %v110, %v154
  %v182 = vadd.f32 %v111, %v154
  %v183 = vadd.f32 %v112, %v154
  %v184 = vadd.f32 %v113, %v154
  %v185 = vadd.f32 %v114, %v154
  %v186 = vadd.f32 %v115, %v154
  %v187 = vadd.f32 %v116, %v154
  %v188 = vadd.f32 %v117, %v154
  %v189 = vadd.f32 %v118, %v154
  %v190 = vadd.f32 %v119, %v154
  %v191 = vadd.f32 %v120, %v154
  %v192 = vadd.f32 %v121, %v154
  %v193 = vadd.f32 %v122, %v154
  %v194 = vadd.f32 %v123, %v154
  %v195 = vadd.f32 %v124, %v154
  %v196 = vadd.f32 %v125, %v154
  %v197 = vadd.f32 %v126, %v154
  %v198 = vadd.f32 %v127, %v154
  %v199 = vadd.f32 %v128, %v154
  %v200 = vadd.f32 %v129, %v154
  %v201 = vadd.f32 %v130, %v154
  %v202 = vadd.f32 %v131, %v154
  %v203 = vadd.f32 %v132, %v154
  %v204 = vadd.f32 %v133, %v154
  %v205 = vadd.f32 %v134, %v154
  %v206 = vadd.f32 %v135, %v154
  %v207 = vadd.f32 %v136, %v154
  %v208 = vadd.f32 %v137, %v154
  %v209 = vadd.f32 %v138, %v154
  %v210 = vadd.f32 %v139, %v154
  %v211 = vadd.f32 %v140, %v154
  %v212 = vadd.f32 %v141, %v154
  %v213 = vadd.f32 %v142, %v154
  %v214 = vadd.f32 %v143, %v154
  %v215 = vadd.f32 %v144, %v154
  %v216 = vadd.f32 %v145, %v154
  %v217 = vadd.f32 %v146, %v154
  %v218 = vadd.f32 %v147, %v154
  %v219 = vadd.f32 %v148, %v154
  %v220 = vmax.f32 %v156, 0.0
  %v221 = vmax.f32 %v157, 0.0
  %v222 = vmax.f32 %v158, 0.0
  %v223 = vmax.f32 %v159, 0.0
  %v224 = vmax.f32 %v160, 0.0
  %v225 = vmax.f32 %v161, 0.0
  %v226 = vmax.f32 %v162, 0.0
  %v227 = vmax.f32 %v163, 0.0
  %v228 = vmax.f32 %v164, 0.0
  %v229 = vmax.f32 %v165, 0.0
  %v230 = vmax.f32 %v166, 0.0
  %v231 = vmax.f32 %v167, 0.0
  %v232 = vmax.f32 %v168, 0.0
  %v233 = vmax.f32 %v169, 0.0
  %v234 = vmax.f32 %v170, 0.0
  %v235 = vmax.f32 %v171, 0.0
  %v236 = vmax.f32 %v172, 0.0
  %v237 = vmax.f32 %v173, 0.0
  %v238 = vmax.f32 %v174, 0.0
  %v239 = vmax.f32 %v175, 0.0
  %v240 = vmax.f32 %v176, 0.0
  %v241 = vmax.f32 %v177, 0.0
  %v242 = vmax.f32 %v178, 0.0
  %v243 = vmax.f32 %v179, 0.0
  %v244 = vmax.f32 %v180, 0.0
  %v245 = vmax.f32 %v181, 0.0
  %v246 = vmax.f32 %v182, 0.0
  %v247 = vmax.f32 %v183, 0.0
  %v248 = vmax.f32 %v184, 0.0
  %v249 = vmax.f32 %v185, 0.0
  %v250 = vmax.f32 %v186, 0.0
  %v251 = vmax.f32 %v187, 0.0
  %v252 = vmax.f32 %v188, 0.0
  %v253 = vmax.f32 %v189, 0.0
  %v254 = vmax.f32 %v190, 0.0
  %v255 = vmax.f32 %v191, 0.0
  %v256 = vmax.f32 %v192, 0.0
  %v257 = vmax.f32 %v193, 0.0
  %v258 = vmax.f32 %v194, 0.0
  %v259 = vmax.f32 %v195, 0.0
  %v260 = vmax.f32 %v196, 0.0
  %v261 = vmax.f32 %v197, 0.0
  %v262 = vmax.f32 %v198, 0.0
  %v263 = vmax.f32 %v199, 0.0
  %v264 = vmax.f32 %v200, 0.0
  %v265 = vmax.f32 %v201, 0.0
  %v266 = vmax.f32 %v202, 0.0
  %v267 = vmax.f32 %v203, 0.0
  %v268 = vmax.f32 %v204, 0.0
  %v269 = vmax.f32 %v205, 0.0
  %v270 = vmax.f32 %v206, 0.0
  %v271 = vmax.f32 %v207, 0.0
  %v272 = vmax.f32 %v208, 0.0
  %v273 = vmax.f32 %v209, 0.0
  %v274 = vmax.f32 %v210, 0.0
  %v275 = vmax.f32 %v211, 0.0
  %v276 = vmax.f32 %v212, 0.0
  %v277 = vmax.f32 %v213, 0.0
  %v278 = vmax.f32 %v214, 0.0
  %v279 = vmax.f32 %v215, 0.0
  %v280 = vmax.f32 %v216, 0.0
  %v281 = vmax.f32 %v217, 0.0
  %v282 = vmax.f32 %v218, 0.0
  %v283 = vmax.f32 %v219, 0.0
  %v284 = vpack.c.bf16 %v221, %v220
  %v285 = vpack.c.bf16 %v223, %v222
  %v286 = vpack.c.bf16 %v225, %v224
  %v287 = vpack.c.bf16 %v227, %v226
  %v288 = vpack.c.bf16 %v229, %v228
  %v289 = vpack.c.bf16 %v231, %v230
  %v290 = vpack.c.bf16 %v233, %v232
  %v291 = vpack.c.bf16 %v235, %v234
  %v292 = vpack.c.bf16 %v237, %v236
  %v293 = vpack.c.bf16 %v239, %v238
  %v294 = vpack.c.bf16 %v241, %v240
  %v295 = vpack.c.bf16 %v243, %v242
  %v296 = vpack.c.bf16 %v245, %v244
  %v297 = vpack.c.bf16 %v247, %v246
  %v298 = vpack.c.bf16 %v249, %v248
  %v299 = vpack.c.bf16 %v251, %v250
  %v300 = vpack.c.bf16 %v253, %v252
  %v301 = vpack.c.bf16 %v255, %v254
  %v302 = vpack.c.bf16 %v257, %v256
  %v303 = vpack.c.bf16 %v259, %v258
  %v304 = vpack.c.bf16 %v261, %v260
  %v305 = vpack.c.bf16 %v263, %v262
  %v306 = vpack.c.bf16 %v265, %v264
  %v307 = vpack.c.bf16 %v267, %v266
  %v308 = vpack.c.bf16 %v269, %v268
  %v309 = vpack.c.bf16 %v271, %v270
  %v310 = vpack.c.bf16 %v273, %v272
  %v311 = vpack.c.bf16 %v275, %v274
  %v312 = vpack.c.bf16 %v277, %v276
  %v313 = vpack.c.bf16 %v279, %v278
  %v314 = vpack.c.bf16 %v281, %v280
  %v315 = vpack.c.bf16 %v283, %v282
  %v348 = vunpack.c.l.b16 %v284
  %v349 = vunpack.c.h.b16 %v284
  %v350 = vunpack.c.l.b16 %v285
  %v351 = vunpack.c.h.b16 %v285
  %v352 = vunpack.c.l.b16 %v286
  %v353 = vunpack.c.h.b16 %v286
  %v354 = vunpack.c.l.b16 %v287
  %v355 = vunpack.c.h.b16 %v287
  %v356 = vunpack.c.l.b16 %v288
  %v357 = vunpack.c.h.b16 %v288
  %v358 = vunpack.c.l.b16 %v289
  %v359 = vunpack.c.h.b16 %v289
  %v360 = vunpack.c.l.b16 %v290
  %v361 = vunpack.c.h.b16 %v290
  %v362 = vunpack.c.l.b16 %v291
  %v363 = vunpack.c.h.b16 %v291
  %v364 = vunpack.c.l.b16 %v292
  %v365 = vunpack.c.h.b16 %v292
  %v366 = vunpack.c.l.b16 %v293
  %v367 = vunpack.c.h.b16 %v293
  %v368 = vunpack.c.l.b16 %v294
  %v369 = vunpack.c.h.b16 %v294
  %v370 = vunpack.c.l.b16 %v295
  %v371 = vunpack.c.h.b16 %v295
  %v372 = vunpack.c.l.b16 %v296
  %v373 = vunpack.c.h.b16 %v296
  %v374 = vunpack.c.l.b16 %v297
  %v375 = vunpack.c.h.b16 %v297
  %v376 = vunpack.c.l.b16 %v298
  %v377 = vunpack.c.h.b16 %v298
  %v378 = vunpack.c.l.b16 %v299
  %v379 = vunpack.c.h.b16 %v299
  %v380 = vunpack.c.l.b16 %v300
  %v381 = vunpack.c.h.b16 %v300
  %v382 = vunpack.c.l.b16 %v301
  %v383 = vunpack.c.h.b16 %v301
  %v384 = vunpack.c.l.b16 %v302
  %v385 = vunpack.c.h.b16 %v302
  %v386 = vunpack.c.l.b16 %v303
  %v387 = vunpack.c.h.b16 %v303
  %v388 = vunpack.c.l.b16 %v304
  %v389 = vunpack.c.h.b16 %v304
  %v390 = vunpack.c.l.b16 %v305
  %v391 = vunpack.c.h.b16 %v305
  %v392 = vunpack.c.l.b16 %v306
  %v393 = vunpack.c.h.b16 %v306
  %v394 = vunpack.c.l.b16 %v307
  %v395 = vunpack.c.h.b16 %v307
  %v396 = vunpack.c.l.b16 %v308
  %v397 = vunpack.c.h.b16 %v308
  %v398 = vunpack.c.l.b16 %v309
  %v399 = vunpack.c.h.b16 %v309
  %v400 = vunpack.c.l.b16 %v310
  %v401 = vunpack.c.h.b16 %v310
  %v402 = vunpack.c.l.b16 %v311
  %v403 = vunpack.c.h.b16 %v311
  %v404 = vunpack.c.l.b16 %v312
  %v405 = vunpack.c.h.b16 %v312
  %v406 = vunpack.c.l.b16 %v313
  %v407 = vunpack.c.h.b16 %v313
  %v408 = vunpack.c.l.b16 %v314
  %v409 = vunpack.c.h.b16 %v314
  %v410 = vunpack.c.l.b16 %v315
  %v411 = vunpack.c.h.b16 %v315
  %v412 = vpack.c.b16 %v348, %v348
  %v413 = vpack.c.b16 %v349, %v349
  %v414 = vpack.c.b16 %v350, %v350
  %v415 = vpack.c.b16 %v351, %v351
  %v416 = vpack.c.b16 %v352, %v352
  %v417 = vpack.c.b16 %v353, %v353
  %v418 = vpack.c.b16 %v354, %v354
  %v419 = vpack.c.b16 %v355, %v355
  %v420 = vpack.c.b16 %v356, %v356
  %v421 = vpack.c.b16 %v357, %v357
  %v422 = vpack.c.b16 %v358, %v358
  %v423 = vpack.c.b16 %v359, %v359
  %v424 = vpack.c.b16 %v360, %v360
  %v425 = vpack.c.b16 %v361, %v361
  %v426 = vpack.c.b16 %v362, %v362
  %v427 = vpack.c.b16 %v363, %v363
  %v428 = vpack.c.b16 %v364, %v364
  %v429 = vpack.c.b16 %v365, %v365
  %v430 = vpack.c.b16 %v366, %v366
  %v431 = vpack.c.b16 %v367, %v367
  %v432 = vpack.c.b16 %v368, %v368
  %v433 = vpack.c.b16 %v369, %v369
  %v434 = vpack.c.b16 %v370, %v370
  %v435 = vpack.c.b16 %v371, %v371
  %v436 = vpack.c.b16 %v372, %v372
  %v437 = vpack.c.b16 %v373, %v373
  %v438 = vpack.c.b16 %v374, %v374
  %v439 = vpack.c.b16 %v375, %v375
  %v440 = vpack.c.b16 %v376, %v376
  %v441 = vpack.c.b16 %v377, %v377
  %v442 = vpack.c.b16 %v378, %v378
  %v443 = vpack.c.b16 %v379, %v379
  %v444 = vpack.c.b16 %v380, %v380
  %v445 = vpack.c.b16 %v381, %v381
  %v446 = vpack.c.b16 %v382, %v382
  %v447 = vpack.c.b16 %v383, %v383
  %v448 = vpack.c.b16 %v384, %v384
  %v449 = vpack.c.b16 %v385, %v385
  %v450 = vpack.c.b16 %v386, %v386
  %v451 = vpack.c.b16 %v387, %v387
  %v452 = vpack.c.b16 %v388, %v388
  %v453 = vpack.c.b16 %v389, %v389
  %v454 = vpack.c.b16 %v390, %v390
  %v455 = vpack.c.b16 %v391, %v391
  %v456 = vpack.c.b16 %v392, %v392
  %v457 = vpack.c.b16 %v393, %v393
  %v458 = vpack.c.b16 %v394, %v394
  %v459 = vpack.c.b16 %v395, %v395
  %v460 = vpack.c.b16 %v396, %v396
  %v461 = vpack.c.b16 %v397, %v397
  %v462 = vpack.c.b16 %v398, %v398
  %v463 = vpack.c.b16 %v399, %v399
  %v464 = vpack.c.b16 %v400, %v400
  %v465 = vpack.c.b16 %v401, %v401
  %v466 = vpack.c.b16 %v402, %v402
  %v467 = vpack.c.b16 %v403, %v403
  %v468 = vpack.c.b16 %v404, %v404
  %v469 = vpack.c.b16 %v405, %v405
  %v470 = vpack.c.b16 %v406, %v406
  %v471 = vpack.c.b16 %v407, %v407
  %v472 = vpack.c.b16 %v408, %v408
  %v473 = vpack.c.b16 %v409, %v409
  %v474 = vpack.c.b16 %v410, %v410
  %v475 = vpack.c.b16 %v411, %v411
  %540 = vst [vmem:[%s3] sm:$0xf] %v412
  %541 = vst [vmem:[%s3 + $0x4] sm:$0xf] %v413
  %542 = vst [vmem:[%s3 + $0x8] sm:$0xf] %v414
  %543 = vst [vmem:[%s3 + $0xc] sm:$0xf] %v415
  %544 = vst [vmem:[%s3 + $0x10] sm:$0xf] %v416
  %545 = vst [vmem:[%s3 + $0x14] sm:$0xf] %v417
  %546 = vst [vmem:[%s3 + $0x18] sm:$0xf] %v418
  %547 = vst [vmem:[%s3 + $0x1c] sm:$0xf] %v419
  %548 = vst [vmem:[%s3 + $0x20] sm:$0xf] %v420
  %549 = vst [vmem:[%s3 + $0x24] sm:$0xf] %v421
  %550 = vst [vmem:[%s3 + $0x28] sm:$0xf] %v422
  %551 = vst [vmem:[%s3 + $0x2c] sm:$0xf] %v423
  %552 = vst [vmem:[%s3 + $0x30] sm:$0xf] %v424
  %553 = vst [vmem:[%s3 + $0x34] sm:$0xf] %v425
  %554 = vst [vmem:[%s3 + $0x38] sm:$0xf] %v426
  %555 = vst [vmem:[%s3 + $0x3c] sm:$0xf] %v427
  %556 = vst [vmem:[%s3 + $0x40] sm:$0xf] %v428
  %557 = vst [vmem:[%s3 + $0x44] sm:$0xf] %v429
  %558 = vst [vmem:[%s3 + $0x48] sm:$0xf] %v430
  %559 = vst [vmem:[%s3 + $0x4c] sm:$0xf] %v431
  %560 = vst [vmem:[%s3 + $0x50] sm:$0xf] %v432
  %561 = vst [vmem:[%s3 + $0x54] sm:$0xf] %v433
  %562 = vst [vmem:[%s3 + $0x58] sm:$0xf] %v434
  %563 = vst [vmem:[%s3 + $0x5c] sm:$0xf] %v435
  %564 = vst [vmem:[%s3 + $0x60] sm:$0xf] %v436
  %565 = vst [vmem:[%s3 + $0x64] sm:$0xf] %v437
  %566 = vst [vmem:[%s3 + $0x68] sm:$0xf] %v438
  %567 = vst [vmem:[%s3 + $0x6c] sm:$0xf] %v439
  %568 = vst [vmem:[%s3 + $0x70] sm:$0xf] %v440
  %569 = vst [vmem:[%s3 + $0x74] sm:$0xf] %v441
  %570 = vst [vmem:[%s3 + $0x78] sm:$0xf] %v442
  %571 = vst [vmem:[%s3 + $0x7c] sm:$0xf] %v443
  %572 = vst [vmem:[%s3 + $0x80] sm:$0xf] %v444
  %573 = vst [vmem:[%s3 + $0x84] sm:$0xf] %v445
  %574 = vst [vmem:[%s3 + $0x88] sm:$0xf] %v446
  %575 = vst [vmem:[%s3 + $0x8c] sm:$0xf] %v447
  %576 = vst [vmem:[%s3 + $0x90] sm:$0xf] %v448
  %577 = vst [vmem:[%s3 + $0x94] sm:$0xf] %v449
  %578 = vst [vmem:[%s3 + $0x98] sm:$0xf] %v450
  %579 = vst [vmem:[%s3 + $0x9c] sm:$0xf] %v451
  %580 = vst [vmem:[%s3 + $0xa0] sm:$0xf] %v452
  %581 = vst [vmem:[%s3 + $0xa4] sm:$0xf] %v453
  %582 = vst [vmem:[%s3 + $0xa8] sm:$0xf] %v454
  %583 = vst [vmem:[%s3 + $0xac] sm:$0xf] %v455
  %584 = vst [vmem:[%s3 + $0xb0] sm:$0xf] %v456
  %585 = vst [vmem:[%s3 + $0xb4] sm:$0xf] %v457
  %586 = vst [vmem:[%s3 + $0xb8] sm:$0xf] %v458
  %587 = vst [vmem:[%s3 + $0xbc] sm:$0xf] %v459
  %588 = vst [vmem:[%s3 + $0xc0] sm:$0xf] %v460
  %589 = vst [vmem:[%s3 + $0xc4] sm:$0xf] %v461
  %590 = vst [vmem:[%s3 + $0xc8] sm:$0xf] %v462
  %591 = vst [vmem:[%s3 + $0xcc] sm:$0xf] %v463
  %592 = vst [vmem:[%s3 + $0xd0] sm:$0xf] %v464
  %593 = vst [vmem:[%s3 + $0xd4] sm:$0xf] %v465
  %594 = vst [vmem:[%s3 + $0xd8] sm:$0xf] %v466
  %595 = vst [vmem:[%s3 + $0xdc] sm:$0xf] %v467
  %596 = vst [vmem:[%s3 + $0xe0] sm:$0xf] %v468
  %597 = vst [vmem:[%s3 + $0xe4] sm:$0xf] %v469
  %598 = vst [vmem:[%s3 + $0xe8] sm:$0xf] %v470
  %599 = vst [vmem:[%s3 + $0xec] sm:$0xf] %v471
  %600 = vst [vmem:[%s3 + $0xf0] sm:$0xf] %v472
  %601 = vst [vmem:[%s3 + $0xf4] sm:$0xf] %v473
  %602 = vst [vmem:[%s3 + $0xf8] sm:$0xf] %v474
  %603 = vst [vmem:[%s3 + $0xfc] sm:$0xf] %v475
  // Predicated region
  $region14: #{basic_block_forward.3} parent=0 // pred_check
    _
  $region15: #{basic_block_forward.3} parent=0 // pred_check_branch
    %605 = sbr.rel (0) target = $region17
  $region16: #{basic_block_forward.3} parent=0 // pred_region
    _
  $region17: #{basic_block_forward.3} parent=0 // pred_fallthru
    _
  // Predicated region
  $region18: #{basic_block_forward.3} parent=0 // pred_check
    _
  $region19: #{basic_block_forward.3} parent=0 // pred_check_branch
    %607 = sbr.rel (0) target = $region21
  $region20: #{basic_block_forward.3} parent=0 // pred_region
    _
  $region21: #{basic_block_forward.3} parent=0 // pred_fallthru
    _

// kernel: basic_block_forward.4
$region0: #{basic_block_forward.4}
  #allocation0 [shape = 'u32[]', space=smem, size = 0x4, offset = 0x4, fixed_abs, tag = 'smem constant byte address 0x4 - core index']
  #allocation1 [shape = 'u32[144,128]{1,0:T(1,128)}', space=vmem, size = 0x12000, scoped, tag = 'internal scratch']
  #allocation2 [shape = 'f32[256,128]{1,0:T(8,128)}', space=vmem, size = 0x20000, scoped, tag = 'scratch operand']
  %s0 = inlined_call_operand.vmem [shape: bf16[512,256], index: 0, kind: input, shape index: {}]
  %s1 = inlined_call_operand.vmem [shape: bf16[256,128], index: 1, kind: input, shape index: {}]
  %s2 = inlined_call_operand.vmem [shape: f32[1,128], index: 2, kind: input, shape index: {}]
  %s3 = inlined_call_operand.vmem [shape: f32[1,128], index: 3, kind: input, shape index: {}]
  %s4 = inlined_call_operand.vmem [shape: bf16[512,128], index: 4, kind: output, shape index: {}]
  %s5 = sld [smem:[#allocation0]]
  $region57: #{basic_block_forward.4} parent=0
    _
  %s7 = ssub.s32 1, %s5
  %s8 = scalar_select 0, %s7, %s5
  loop: start=0, step=1, limit=4
  $region2: #{basic_block_forward.4} parent=0 // loop_pre_header
    _
  $region3: #{basic_block_forward.4} parent=0 // loop_header
    %s10 = sphi 0, %s14
    %p11 = scmp.ge.s32.totalorder %s10, 4
    %s17 = sphi 0, %s36
    %s18 = sphi 0, %s32
    %s19 = sphi 0, %s28
    %s20 = sphi 0, %s17
    %s21 = sphi 0, %s18
    %s22 = sphi 0, %s19
    %s23 = sphi 0, %s20
    %s24 = sphi 0, %s21
    %s25 = sphi 0, %s22
    %s41 = sphi 0, %s43
    %s44 = sphi 0, %s41
    %s45 = sphi 0, %s44
    %s61 = sphi 0, %s45
    %s69 = sphi 0, %s71
    %s72 = sphi 0, %s69
    %s73 = sphi 0, %s72
    %s89 = sphi 0, %s73
    %s95 = sphi 0, %s97
    %s98 = sphi 0, %s95
    %s99 = sphi 0, %s98
    %s115 = sphi 0, %s99
    %s121 = sphi 0, %s123
    %s124 = sphi 0, %s121
    %s125 = sphi 0, %s124
    %s141 = sphi 0, %s125
    %s149 = sphi 0, %s151
    %s152 = sphi 0, %s149
    %s153 = sphi 0, %s152
    %s169 = sphi 0, %s153
  $region4: #{basic_block_forward.4} parent=0 // loop_header_branch
    %13 = sbr.rel (%p11) target = $region8
  $region5: #{basic_block_forward.4} parent=0 // loop_body
    %s15 = ssub.s32 %s10, 1
    %s16 = ssub.s32 %s10, 2
    %s26 = sadd.s32 1, %s19
    %p27 = scmp.ge.s32.totalorder %s26, 1
    %s28 = scalar_select %p27, 0, %s26
    %s29 = sadd.s32 1, %s18
    %s30 = scalar_select %p27, %s29, %s18
    %p31 = scmp.ge.s32.totalorder %s30, 1
    %s32 = scalar_select %p31, 0, %s30
    %s33 = sadd.s32 1, %s17
    %s34 = scalar_select %p31, %s33, %s17
    %p35 = scmp.ge.s32.totalorder %s34, 2
    %s36 = scalar_select %p35, 0, %s34
    %s37 = ssub.s32 %s17, %s36
    %s38 = ssub.s32 %s19, %s28
    %s39 = sor.u32 %s37, %s38
    %p40 = scmp.eq.s32.totalorder %s39, 0
    %s42 = sadd.s32 %s41, 1
    %s43 = scalar_select %p40, %s41, %s42
    %p46 = pneg %p40
    %p47 = scmp.eq.s32.totalorder %s10, 1
    %p48 = por %p46, %p47
    %p49 = scmp.ne.s32.totalorder %s41, %s44
    %p50 = scmp.eq.s32.totalorder %s10, 0
    %p51 = por %p49, %p50
    %p52 = scmp.ne.s32.totalorder %s41, %s44
    %p53 = scmp.eq.s32.totalorder %s15, 1
    %p54 = por %p52, %p53
    %p55 = scmp.ne.s32.totalorder %s44, %s45
    %p56 = scmp.eq.s32.totalorder %s15, 0
    %p57 = por %p55, %p56
    %p58 = scmp.ne.s32.totalorder %s44, %s45
    %p59 = scmp.eq.s32.totalorder %s16, 1
    %p60 = por %p58, %p59
    %p62 = scmp.ne.s32.totalorder %s45, %s61
    %p63 = scmp.eq.s32.totalorder %s16, 0
    %p64 = por %p62, %p63
    %s65 = ssub.s32 %s19, %s28
    %s66 = ssub.s32 %s18, %s32
    %s67 = sor.u32 %s65, %s66
    %p68 = scmp.eq.s32.totalorder %s67, 0
    %s70 = sadd.s32 %s69, 1
    %s71 = scalar_select %p68, %s69, %s70
    %p74 = pneg %p68
    %p75 = scmp.eq.s32.totalorder %s10, 1
    %p76 = por %p74, %p75
    %p77 = scmp.ne.s32.totalorder %s69, %s72
    %p78 = scmp.eq.s32.totalorder %s10, 0
    %p79 = por %p77, %p78
    %p80 = scmp.ne.s32.totalorder %s69, %s72
    %p81 = scmp.eq.s32.totalorder %s15, 1
    %p82 = por %p80, %p81
    %p83 = scmp.ne.s32.totalorder %s72, %s73
    %p84 = scmp.eq.s32.totalorder %s15, 0
    %p85 = por %p83, %p84
    %p86 = scmp.ne.s32.totalorder %s72, %s73
    %p87 = scmp.eq.s32.totalorder %s16, 1
    %p88 = por %p86, %p87
    %p90 = scmp.ne.s32.totalorder %s73, %s89
    %p91 = scmp.eq.s32.totalorder %s16, 0
    %p92 = por %p90, %p91
    %s93 = ssub.s32 %s18, %s32
    %p94 = scmp.eq.s32.totalorder %s93, 0
    %s96 = sadd.s32 %s95, 1
    %s97 = scalar_select %p94, %s95, %s96
    %p100 = pneg %p94
    %p101 = scmp.eq.s32.totalorder %s10, 1
    %p102 = por %p100, %p101
    %p103 = scmp.ne.s32.totalorder %s95, %s98
    %p104 = scmp.eq.s32.totalorder %s10, 0
    %p105 = por %p103, %p104
    %p106 = scmp.ne.s32.totalorder %s95, %s98
    %p107 = scmp.eq.s32.totalorder %s15, 1
    %p108 = por %p106, %p107
    %p109 = scmp.ne.s32.totalorder %s98, %s99
    %p110 = scmp.eq.s32.totalorder %s15, 0
    %p111 = por %p109, %p110
    %p112 = scmp.ne.s32.totalorder %s98, %s99
    %p113 = scmp.eq.s32.totalorder %s16, 1
    %p114 = por %p112, %p113
    %p116 = scmp.ne.s32.totalorder %s99, %s115
    %p117 = scmp.eq.s32.totalorder %s16, 0
    %p118 = por %p116, %p117
    %s119 = ssub.s32 %s18, %s32
    %p120 = scmp.eq.s32.totalorder %s119, 0
    %s122 = sadd.s32 %s121, 1
    %s123 = scalar_select %p120, %s121, %s122
    %p126 = pneg %p120
    %p127 = scmp.eq.s32.totalorder %s10, 1
    %p128 = por %p126, %p127
    %p129 = scmp.ne.s32.totalorder %s121, %s124
    %p130 = scmp.eq.s32.totalorder %s10, 0
    %p131 = por %p129, %p130
    %p132 = scmp.ne.s32.totalorder %s121, %s124
    %p133 = scmp.eq.s32.totalorder %s15, 1
    %p134 = por %p132, %p133
    %p135 = scmp.ne.s32.totalorder %s124, %s125
    %p136 = scmp.eq.s32.totalorder %s15, 0
    %p137 = por %p135, %p136
    %p138 = scmp.ne.s32.totalorder %s124, %s125
    %p139 = scmp.eq.s32.totalorder %s16, 1
    %p140 = por %p138, %p139
    %p142 = scmp.ne.s32.totalorder %s125, %s141
    %p143 = scmp.eq.s32.totalorder %s16, 0
    %p144 = por %p142, %p143
    %s145 = ssub.s32 %s17, %s36
    %s146 = ssub.s32 %s18, %s32
    %s147 = sor.u32 %s145, %s146
    %p148 = scmp.eq.s32.totalorder %s147, 0
    %s150 = sadd.s32 %s149, 1
    %s151 = scalar_select %p148, %s149, %s150
    %p154 = pneg %p148
    %p155 = scmp.eq.s32.totalorder %s10, 1
    %p156 = por %p154, %p155
    %p157 = scmp.ne.s32.totalorder %s149, %s152
    %p158 = scmp.eq.s32.totalorder %s10, 0
    %p159 = por %p157, %p158
    %p160 = scmp.ne.s32.totalorder %s149, %s152
    %p161 = scmp.eq.s32.totalorder %s15, 1
    %p162 = por %p160, %p161
    %p163 = scmp.ne.s32.totalorder %s152, %s153
    %p164 = scmp.eq.s32.totalorder %s15, 0
    %p165 = por %p163, %p164
    %p166 = scmp.ne.s32.totalorder %s152, %s153
    %p167 = scmp.eq.s32.totalorder %s16, 1
    %p168 = por %p166, %p167
    %p170 = scmp.ne.s32.totalorder %s153, %s169
    %p171 = scmp.eq.s32.totalorder %s16, 0
    %p172 = por %p170, %p171
    %p173 = scmp.le.s32.totalorder 1, %s10
    %p174 = scmp.lt.s32.totalorder %s10, 3
    %p175 = pnand %p173, %p174
    %p176 = pneg %p175
    // Predicated region
    $region9: #{basic_block_forward.4} parent=5 // pred_check
      _
    $region10: #{basic_block_forward.4} parent=5 // pred_check_branch
      %178 = sbr.rel (%p175) target = $region12
    $region11: #{basic_block_forward.4} parent=5 // pred_region
      %s179 = ssub.s32 %s10, 1
      // Predicated region
      $region13: #{basic_block_forward.4} parent=11 // pred_check
        %p180 = pneg %p85
      $region14: #{basic_block_forward.4} parent=11 // pred_check_branch
        %182 = sbr.rel (%p180) target = $region16
      $region15: #{basic_block_forward.4} parent=11 // pred_region
        %s183 = smul.u32 32, %s22
        %p184 = scmp.lt.s32.totalorder %s183, 31
        %s185 = scalar_select %p184, %s183, 31
        %p186 = scmp.lt.s32.totalorder %s21, 0
        %s187 = scalar_select %p186, %s21, 0
        %s188 = sadd.s32 %s187, %s185
        %s189 = smul.addr %s188, 4
        %s190 = scalar_lea.vmem %s1, %s189
        %s191 = smul.u32 32, %s22
      $region16: #{basic_block_forward.4} parent=11 // pred_fallthru
        _
      // Predicated region
      $region17: #{basic_block_forward.4} parent=11 // pred_check
        %p192 = pneg %p111
      $region18: #{basic_block_forward.4} parent=11 // pred_check_branch
        %194 = sbr.rel (%p192) target = $region20
      $region19: #{basic_block_forward.4} parent=11 // pred_region
        %p195 = scmp.lt.s32.totalorder %s21, 0
        %s196 = scalar_select %p195, %s21, 0
        %s197 = scalar_lea.vmem %s2, %s196
      $region20: #{basic_block_forward.4} parent=11 // pred_fallthru
        _
      // Predicated region
      $region21: #{basic_block_forward.4} parent=11 // pred_check
        %p198 = pneg %p137
      $region22: #{basic_block_forward.4} parent=11 // pred_check_branch
        %200 = sbr.rel (%p198) target = $region24
      $region23: #{basic_block_forward.4} parent=11 // pred_region
        %p201 = scmp.lt.s32.totalorder %s21, 0
        %s202 = scalar_select %p201, %s21, 0
        %s203 = scalar_lea.vmem %s3, %s202
      $region24: #{basic_block_forward.4} parent=11 // pred_fallthru
        _
    $region12: #{basic_block_forward.4} parent=5 // pred_fallthru
      _
    %p204 = scmp.lt.s32.totalorder %s10, 2
    // Predicated region
    $region25: #{basic_block_forward.4} parent=5 // pred_check
      %p205 = pneg %p204
    $region26: #{basic_block_forward.4} parent=5 // pred_check_branch
      %207 = sbr.rel (%p205) target = $region28
    $region27: #{basic_block_forward.4} parent=5 // pred_region
      // Predicated region
      $region29: #{basic_block_forward.4} parent=27 // pred_check
        %p208 = pneg %p51
      $region30: #{basic_block_forward.4} parent=27 // pred_check_branch
        %210 = sbr.rel (%p208) target = $region32
      $region31: #{basic_block_forward.4} parent=27 // pred_region
        %s211 = smul.u32 32, %s17
        %s212 = smul.u32 2, %s19
        %p213 = scmp.lt.s32.totalorder %s211, 63
        %s214 = scalar_select %p213, %s211, 63
        %p215 = scmp.lt.s32.totalorder %s212, 1
        %s216 = scalar_select %p215, %s212, 1
        %s217 = smul.addr %s214, 2
        %s218 = sadd.s32 %s216, %s217
        %s219 = smul.addr %s218, 4
        %s220 = scalar_lea.vmem %s0, %s219
        %s221 = smul.u32 32, %s17
        %s222 = smul.u32 2, %s19
      $region32: #{basic_block_forward.4} parent=27 // pred_fallthru
        _
    $region28: #{basic_block_forward.4} parent=5 // pred_fallthru
      _
    %p223 = scmp.le.s32.totalorder 1, %s10
    %p224 = scmp.lt.s32.totalorder %s10, 3
    %p225 = pnand %p223, %p224
    %p226 = pneg %p225
    // Predicated region
    $region33: #{basic_block_forward.4} parent=5 // pred_check
      _
    $region34: #{basic_block_forward.4} parent=5 // pred_check_branch
      %228 = sbr.rel (%p225) target = $region36
    $region35: #{basic_block_forward.4} parent=5 // pred_region
      %s229 = ssub.s32 %s10, 1
      %s230 = smul.u32 32, %s20
      %s231 = smul.u32 2, %s22
      %p232 = scmp.lt.s32.totalorder %s230, 63
      %s233 = scalar_select %p232, %s230, 63
      %p234 = scmp.lt.s32.totalorder %s231, 1
      %s235 = scalar_select %p234, %s231, 1
      %s236 = smul.addr %s233, 2
      %s237 = sadd.s32 %s235, %s236
      %s238 = smul.addr %s237, 4
      %s239 = scalar_lea.vmem %s0, %s238
      %p240 = pneg %p57
      %p241 = pneg %p54
      %s242 = smul.u32 32, %s22
      %p243 = scmp.lt.s32.totalorder %s242, 31
      %s244 = scalar_select %p243, %s242, 31
      %p245 = scmp.lt.s32.totalorder %s21, 0
      %s246 = scalar_select %p245, %s21, 0
      %s247 = sadd.s32 %s246, %s244
      %s248 = smul.addr %s247, 4
      %s249 = scalar_lea.vmem %s1, %s248
      %p250 = pneg %p85
      %p251 = pneg %p82
      %p252 = scmp.lt.s32.totalorder %s21, 0
      %s253 = scalar_select %p252, %s21, 0
      %s254 = scalar_lea.vmem %s2, %s253
      %p255 = pneg %p111
      %p256 = pneg %p108
      %p257 = scmp.lt.s32.totalorder %s21, 0
      %s258 = scalar_select %p257, %s21, 0
      %s259 = scalar_lea.vmem %s3, %s258
      %p260 = pneg %p137
      %p261 = pneg %p134
      %p262 = pneg %p165
      %p263 = pneg %p162
      %s264 = smul.u32 32, %s20
      %p265 = scmp.lt.s32.totalorder %s264, 63
      %s266 = scalar_select %p265, %s264, 63
      %p267 = scmp.lt.s32.totalorder %s21, 0
      %s268 = scalar_select %p267, %s21, 0
      %s269 = sadd.s32 %s268, %s266
      %s270 = smul.addr %s269, 4
      %s271 = scalar_lea.vmem %s4, %s270
      %s272 = smul.u32 32, %s20
      %s273 = smul.u32 2, %s22
      %p274 = scmp.lt.s32.totalorder %s272, 63
      %s275 = scalar_select %p274, %s272, 63
      %p276 = scmp.lt.s32.totalorder %s273, 1
      %s277 = scalar_select %p276, %s273, 1
      %s278 = smul.addr %s275, 2
      %s279 = sadd.s32 %s277, %s278
      %s280 = smul.addr %s279, 4
      %s281 = scalar_lea.vmem %s0, %s280
      %s282 = smul.u32 32, %s20
      %s283 = smul.u32 2, %s22
      %s284 = smul.u32 32, %s22
      %p285 = scmp.lt.s32.totalorder %s284, 31
      %s286 = scalar_select %p285, %s284, 31
      %p287 = scmp.lt.s32.totalorder %s21, 0
      %s288 = scalar_select %p287, %s21, 0
      %s289 = sadd.s32 %s288, %s286
      %s290 = smul.addr %s289, 4
      %s291 = scalar_lea.vmem %s1, %s290
      %s292 = smul.u32 32, %s22
      %p293 = scmp.lt.s32.totalorder %s21, 0
      %s294 = scalar_select %p293, %s21, 0
      %s295 = scalar_lea.vmem %s2, %s294
      %p296 = scmp.lt.s32.totalorder %s21, 0
      %s297 = scalar_select %p296, %s21, 0
      %s298 = scalar_lea.vmem %s3, %s297
      %s299 = smul.u32 32, %s20
      %p300 = scmp.lt.s32.totalorder %s299, 63
      %s301 = scalar_select %p300, %s299, 63
      %p302 = scmp.lt.s32.totalorder %s21, 0
      %s303 = scalar_select %p302, %s21, 0
      %s304 = sadd.s32 %s303, %s301
      %s305 = smul.addr %s304, 4
      %s306 = scalar_lea.vmem %s4, %s305
      %s307 = smul.u32 32, %s20
      %p309 = scmp.eq.s32.totalorder %s22, 0
      // Predicated region
      $region37: #{basic_block_forward.4} parent=35 // pred_check
        %p310 = pneg %p309
      $region38: #{basic_block_forward.4} parent=35 // pred_check_branch
        %312 = sbr.rel (%p310) target = $region40
      $region39: #{basic_block_forward.4} parent=35 // pred_region
        %313 = vst [vmem:[#allocation2] sm:$0xff] 0.0
        %314 = vst [vmem:[#allocation2 + $0x8] sm:$0xff] 0.0
        %315 = vst [vmem:[#allocation2 + $0x10] sm:$0xff] 0.0
        %316 = vst [vmem:[#allocation2 + $0x18] sm:$0xff] 0.0
        %317 = vst [vmem:[#allocation2 + $0x20] sm:$0xff] 0.0
        %318 = vst [vmem:[#allocation2 + $0x28] sm:$0xff] 0.0
        %319 = vst [vmem:[#allocation2 + $0x30] sm:$0xff] 0.0
        %320 = vst [vmem:[#allocation2 + $0x38] sm:$0xff] 0.0
        %321 = vst [vmem:[#allocation2 + $0x40] sm:$0xff] 0.0
        %322 = vst [vmem:[#allocation2 + $0x48] sm:$0xff] 0.0
        %323 = vst [vmem:[#allocation2 + $0x50] sm:$0xff] 0.0
        %324 = vst [vmem:[#allocation2 + $0x58] sm:$0xff] 0.0
        %325 = vst [vmem:[#allocation2 + $0x60] sm:$0xff] 0.0
        %326 = vst [vmem:[#allocation2 + $0x68] sm:$0xff] 0.0
        %327 = vst [vmem:[#allocation2 + $0x70] sm:$0xff] 0.0
        %328 = vst [vmem:[#allocation2 + $0x78] sm:$0xff] 0.0
        %329 = vst [vmem:[#allocation2 + $0x80] sm:$0xff] 0.0
        %330 = vst [vmem:[#allocation2 + $0x88] sm:$0xff] 0.0
        %331 = vst [vmem:[#allocation2 + $0x90] sm:$0xff] 0.0
        %332 = vst [vmem:[#allocation2 + $0x98] sm:$0xff] 0.0
        %333 = vst [vmem:[#allocation2 + $0xa0] sm:$0xff] 0.0
        %334 = vst [vmem:[#allocation2 + $0xa8] sm:$0xff] 0.0
        %335 = vst [vmem:[#allocation2 + $0xb0] sm:$0xff] 0.0
        %336 = vst [vmem:[#allocation2 + $0xb8] sm:$0xff] 0.0
        %337 = vst [vmem:[#allocation2 + $0xc0] sm:$0xff] 0.0
        %338 = vst [vmem:[#allocation2 + $0xc8] sm:$0xff] 0.0
        %339 = vst [vmem:[#allocation2 + $0xd0] sm:$0xff] 0.0
        %340 = vst [vmem:[#allocation2 + $0xd8] sm:$0xff] 0.0
        %341 = vst [vmem:[#allocation2 + $0xe0] sm:$0xff] 0.0
        %342 = vst [vmem:[#allocation2 + $0xe8] sm:$0xff] 0.0
        %343 = vst [vmem:[#allocation2 + $0xf0] sm:$0xff] 0.0
        %344 = vst [vmem:[#allocation2 + $0xf8] sm:$0xff] 0.0
      $region40: #{basic_block_forward.4} parent=35 // pred_fallthru
        _
      %v345 = vld [vmem:[#allocation2] sm:$0xff]
      %v346 = vld [vmem:[#allocation2 + $0x8] sm:$0xff]
      %v347 = vld [vmem:[#allocation2 + $0x10] sm:$0xff]
      %v348 = vld [vmem:[#allocation2 + $0x18] sm:$0xff]
      %v349 = vld [vmem:[#allocation2 + $0x20] sm:$0xff]
      %v350 = vld [vmem:[#allocation2 + $0x28] sm:$0xff]
      %v351 = vld [vmem:[#allocation2 + $0x30] sm:$0xff]
      %v352 = vld [vmem:[#allocation2 + $0x38] sm:$0xff]
      %v353 = vld [vmem:[#allocation2 + $0x40] sm:$0xff]
      %v354 = vld [vmem:[#allocation2 + $0x48] sm:$0xff]
      %v355 = vld [vmem:[#allocation2 + $0x50] sm:$0xff]
      %v356 = vld [vmem:[#allocation2 + $0x58] sm:$0xff]
      %v357 = vld [vmem:[#allocation2 + $0x60] sm:$0xff]
      %v358 = vld [vmem:[#allocation2 + $0x68] sm:$0xff]
      %v359 = vld [vmem:[#allocation2 + $0x70] sm:$0xff]
      %v360 = vld [vmem:[#allocation2 + $0x78] sm:$0xff]
      %v361 = vld [vmem:[#allocation2 + $0x80] sm:$0xff]
      %v362 = vld [vmem:[#allocation2 + $0x88] sm:$0xff]
      %v363 = vld [vmem:[#allocation2 + $0x90] sm:$0xff]
      %v364 = vld [vmem:[#allocation2 + $0x98] sm:$0xff]
      %v365 = vld [vmem:[#allocation2 + $0xa0] sm:$0xff]
      %v366 = vld [vmem:[#allocation2 + $0xa8] sm:$0xff]
      %v367 = vld [vmem:[#allocation2 + $0xb0] sm:$0xff]
      %v368 = vld [vmem:[#allocation2 + $0xb8] sm:$0xff]
      %v369 = vld [vmem:[#allocation2 + $0xc0] sm:$0xff]
      %v370 = vld [vmem:[#allocation2 + $0xc8] sm:$0xff]
      %v371 = vld [vmem:[#allocation2 + $0xd0] sm:$0xff]
      %v372 = vld [vmem:[#allocation2 + $0xd8] sm:$0xff]
      %v373 = vld [vmem:[#allocation2 + $0xe0] sm:$0xff]
      %v374 = vld [vmem:[#allocation2 + $0xe8] sm:$0xff]
      %v375 = vld [vmem:[#allocation2 + $0xf0] sm:$0xff]
      %v376 = vld [vmem:[#allocation2 + $0xf8] sm:$0xff]
      %v377 = vld [vmem:[%s281] sm:$0xff]
      %v378 = vld [vmem:[%s281 + $0x8] sm:$0xff]
      %v379 = vld [vmem:[%s281 + $0x10] sm:$0xff]
      %v380 = vld [vmem:[%s281 + $0x18] sm:$0xff]
      %v381 = vld [vmem:[%s281 + $0x20] sm:$0xff]
      %v382 = vld [vmem:[%s281 + $0x28] sm:$0xff]
      %v383 = vld [vmem:[%s281 + $0x30] sm:$0xff]
      %v384 = vld [vmem:[%s281 + $0x38] sm:$0xff]
      %v385 = vld [vmem:[%s281 + $0x40] sm:$0xff]
      %v386 = vld [vmem:[%s281 + $0x48] sm:$0xff]
      %v387 = vld [vmem:[%s281 + $0x50] sm:$0xff]
      %v388 = vld [vmem:[%s281 + $0x58] sm:$0xff]
      %v389 = vld [vmem:[%s281 + $0x60] sm:$0xff]
      %v390 = vld [vmem:[%s281 + $0x68] sm:$0xff]
      %v391 = vld [vmem:[%s281 + $0x70] sm:$0xff]
      %v392 = vld [vmem:[%s281 + $0x78] sm:$0xff]
      %v393 = vld [vmem:[%s281 + $0x80] sm:$0xff]
      %v394 = vld [vmem:[%s281 + $0x88] sm:$0xff]
      %v395 = vld [vmem:[%s281 + $0x90] sm:$0xff]
      %v396 = vld [vmem:[%s281 + $0x98] sm:$0xff]
      %v397 = vld [vmem:[%s281 + $0xa0] sm:$0xff]
      %v398 = vld [vmem:[%s281 + $0xa8] sm:$0xff]
      %v399 = vld [vmem:[%s281 + $0xb0] sm:$0xff]
      %v400 = vld [vmem:[%s281 + $0xb8] sm:$0xff]
      %v401 = vld [vmem:[%s281 + $0xc0] sm:$0xff]
      %v402 = vld [vmem:[%s281 + $0xc8] sm:$0xff]
      %v403 = vld [vmem:[%s281 + $0xd0] sm:$0xff]
      %v404 = vld [vmem:[%s281 + $0xd8] sm:$0xff]
      %v405 = vld [vmem:[%s281 + $0xe0] sm:$0xff]
      %v406 = vld [vmem:[%s281 + $0xe8] sm:$0xff]
      %v407 = vld [vmem:[%s281 + $0xf0] sm:$0xff]
      %v408 = vld [vmem:[%s281 + $0xf8] sm:$0xff]
      %v409 = vld [vmem:[%s291] sm:$0xf]
      %v410 = vld [vmem:[%s291 + $0x4] sm:$0xf]
      %v411 = vld [vmem:[%s291 + $0x8] sm:$0xf]
      %v412 = vld [vmem:[%s291 + $0xc] sm:$0xf]
      %v413 = vld [vmem:[%s291 + $0x10] sm:$0xf]
      %v414 = vld [vmem:[%s291 + $0x14] sm:$0xf]
      %v415 = vld [vmem:[%s291 + $0x18] sm:$0xf]
      %v416 = vld [vmem:[%s291 + $0x1c] sm:$0xf]
      %v417 = vld [vmem:[%s291 + $0x20] sm:$0xf]
      %v418 = vld [vmem:[%s291 + $0x24] sm:$0xf]
      %v419 = vld [vmem:[%s291 + $0x28] sm:$0xf]
      %v420 = vld [vmem:[%s291 + $0x2c] sm:$0xf]
      %v421 = vld [vmem:[%s291 + $0x30] sm:$0xf]
      %v422 = vld [vmem:[%s291 + $0x34] sm:$0xf]
      %v423 = vld [vmem:[%s291 + $0x38] sm:$0xf]
      %v424 = vld [vmem:[%s291 + $0x3c] sm:$0xf]
      %v425 = vld [vmem:[%s291 + $0x40] sm:$0xf]
      %v426 = vld [vmem:[%s291 + $0x44] sm:$0xf]
      %v427 = vld [vmem:[%s291 + $0x48] sm:$0xf]
      %v428 = vld [vmem:[%s291 + $0x4c] sm:$0xf]
      %v429 = vld [vmem:[%s291 + $0x50] sm:$0xf]
      %v430 = vld [vmem:[%s291 + $0x54] sm:$0xf]
      %v431 = vld [vmem:[%s291 + $0x58] sm:$0xf]
      %v432 = vld [vmem:[%s291 + $0x5c] sm:$0xf]
      %v433 = vld [vmem:[%s291 + $0x60] sm:$0xf]
      %v434 = vld [vmem:[%s291 + $0x64] sm:$0xf]
      %v435 = vld [vmem:[%s291 + $0x68] sm:$0xf]
      %v436 = vld [vmem:[%s291 + $0x6c] sm:$0xf]
      %v437 = vld [vmem:[%s291 + $0x70] sm:$0xf]
      %v438 = vld [vmem:[%s291 + $0x74] sm:$0xf]
      %v439 = vld [vmem:[%s291 + $0x78] sm:$0xf]
      %v440 = vld [vmem:[%s291 + $0x7c] sm:$0xf]
      %v473 = vunpack.c.l.b16 %v377
      %v474 = vunpack.c.h.b16 %v377
      %v475 = vunpack.c.l.b16 %v378
      %v476 = vunpack.c.h.b16 %v378
      %v477 = vunpack.c.l.b16 %v379
      %v478 = vunpack.c.h.b16 %v379
      %v479 = vunpack.c.l.b16 %v380
      %v480 = vunpack.c.h.b16 %v380
      %v481 = vunpack.c.l.b16 %v381
      %v482 = vunpack.c.h.b16 %v381
      %v483 = vunpack.c.l.b16 %v382
      %v484 = vunpack.c.h.b16 %v382
      %v485 = vunpack.c.l.b16 %v383
      %v486 = vunpack.c.h.b16 %v383
      %v487 = vunpack.c.l.b16 %v384
      %v488 = vunpack.c.h.b16 %v384
      %v489 = vunpack.c.l.b16 %v385
      %v490 = vunpack.c.h.b16 %v385
      %v491 = vunpack.c.l.b16 %v386
      %v492 = vunpack.c.h.b16 %v386
      %v493 = vunpack.c.l.b16 %v387
      %v494 = vunpack.c.h.b16 %v387
      %v495 = vunpack.c.l.b16 %v388
      %v496 = vunpack.c.h.b16 %v388
      %v497 = vunpack.c.l.b16 %v389
      %v498 = vunpack.c.h.b16 %v389
      %v499 = vunpack.c.l.b16 %v390
      %v500 = vunpack.c.h.b16 %v390
      %v501 = vunpack.c.l.b16 %v391
      %v502 = vunpack.c.h.b16 %v391
      %v503 = vunpack.c.l.b16 %v392
      %v504 = vunpack.c.h.b16 %v392
      %v505 = vunpack.c.l.b16 %v393
      %v506 = vunpack.c.h.b16 %v393
      %v507 = vunpack.c.l.b16 %v394
      %v508 = vunpack.c.h.b16 %v394
      %v509 = vunpack.c.l.b16 %v395
      %v510 = vunpack.c.h.b16 %v395
      %v511 = vunpack.c.l.b16 %v396
      %v512 = vunpack.c.h.b16 %v396
      %v513 = vunpack.c.l.b16 %v397
      %v514 = vunpack.c.h.b16 %v397
      %v515 = vunpack.c.l.b16 %v398
      %v516 = vunpack.c.h.b16 %v398
      %v517 = vunpack.c.l.b16 %v399
      %v518 = vunpack.c.h.b16 %v399
      %v519 = vunpack.c.l.b16 %v400
      %v520 = vunpack.c.h.b16 %v400
      %v521 = vunpack.c.l.b16 %v401
      %v522 = vunpack.c.h.b16 %v401
      %v523 = vunpack.c.l.b16 %v402
      %v524 = vunpack.c.h.b16 %v402
      %v525 = vunpack.c.l.b16 %v403
      %v526 = vunpack.c.h.b16 %v403
      %v527 = vunpack.c.l.b16 %v404
      %v528 = vunpack.c.h.b16 %v404
      %v529 = vunpack.c.l.b16 %v405
      %v530 = vunpack.c.h.b16 %v405
      %v531 = vunpack.c.l.b16 %v406
      %v532 = vunpack.c.h.b16 %v406
      %v533 = vunpack.c.l.b16 %v407
      %v534 = vunpack.c.h.b16 %v407
      %v535 = vunpack.c.l.b16 %v408
      %v536 = vunpack.c.h.b16 %v408
      %v537 = vpack.c.b16 %v475, %v473
      %v538 = vpack.c.b16 %v476, %v474
      %v539 = vpack.c.b16 %v479, %v477
      %v540 = vpack.c.b16 %v480, %v478
      %v541 = vpack.c.b16 %v483, %v481
      %v542 = vpack.c.b16 %v484, %v482
      %v543 = vpack.c.b16 %v487, %v485
      %v544 = vpack.c.b16 %v488, %v486
      %v545 = vpack.c.b16 %v491, %v489
      %v546 = vpack.c.b16 %v492, %v490
      %v547 = vpack.c.b16 %v495, %v493
      %v548 = vpack.c.b16 %v496, %v494
      %v549 = vpack.c.b16 %v499, %v497
      %v550 = vpack.c.b16 %v500, %v498
      %v551 = vpack.c.b16 %v503, %v501
      %v552 = vpack.c.b16 %v504, %v502
      %v553 = vpack.c.b16 %v507, %v505
      %v554 = vpack.c.b16 %v508, %v506
      %v555 = vpack.c.b16 %v511, %v509
      %v556 = vpack.c.b16 %v512, %v510
      %v557 = vpack.c.b16 %v515, %v513
      %v558 = vpack.c.b16 %v516, %v514
      %v559 = vpack.c.b16 %v519, %v517
      %v560 = vpack.c.b16 %v520, %v518
      %v561 = vpack.c.b16 %v523, %v521
      %v562 = vpack.c.b16 %v524, %v522
      %v563 = vpack.c.b16 %v527, %v525
      %v564 = vpack.c.b16 %v528, %v526
      %v565 = vpack.c.b16 %v531, %v529
      %v566 = vpack.c.b16 %v532, %v530
      %v567 = vpack.c.b16 %v535, %v533
      %v568 = vpack.c.b16 %v536, %v534
      %v633 = vunpack.c.l.b16 %v409
      %v634 = vunpack.c.l.b16 %v410
      %v635 = vunpack.c.l.b16 %v411
      %v636 = vunpack.c.l.b16 %v412
      %v637 = vunpack.c.l.b16 %v413
      %v638 = vunpack.c.l.b16 %v414
      %v639 = vunpack.c.l.b16 %v415
      %v640 = vunpack.c.l.b16 %v416
      %v641 = vunpack.c.l.b16 %v417
      %v642 = vunpack.c.l.b16 %v418
      %v643 = vunpack.c.l.b16 %v419
      %v644 = vunpack.c.l.b16 %v420
      %v645 = vunpack.c.l.b16 %v421
      %v646 = vunpack.c.l.b16 %v422
      %v647 = vunpack.c.l.b16 %v423
      %v648 = vunpack.c.l.b16 %v424
      %v649 = vunpack.c.l.b16 %v425
      %v650 = vunpack.c.l.b16 %v426
      %v651 = vunpack.c.l.b16 %v427
      %v652 = vunpack.c.l.b16 %v428
      %v653 = vunpack.c.l.b16 %v429
      %v654 = vunpack.c.l.b16 %v430
      %v655 = vunpack.c.l.b16 %v431
      %v656 = vunpack.c.l.b16 %v432
      %v657 = vunpack.c.l.b16 %v433
      %v658 = vunpack.c.l.b16 %v434
      %v659 = vunpack.c.l.b16 %v435
      %v660 = vunpack.c.l.b16 %v436
      %v661 = vunpack.c.l.b16 %v437
      %v662 = vunpack.c.l.b16 %v438
      %v663 = vunpack.c.l.b16 %v439
      %v664 = vunpack.c.l.b16 %v440
      %v665 = vpack.c.b16 %v634, %v633
      %v666 = vpack.c.b16 %v636, %v635
      %v667 = vpack.c.b16 %v638, %v637
      %v668 = vpack.c.b16 %v640, %v639
      %v669 = vpack.c.b16 %v642, %v641
      %v670 = vpack.c.b16 %v644, %v643
      %v671 = vpack.c.b16 %v646, %v645
      %v672 = vpack.c.b16 %v648, %v647
      %v673 = vpack.c.b16 %v650, %v649
      %v674 = vpack.c.b16 %v652, %v651
      %v675 = vpack.c.b16 %v654, %v653
      %v676 = vpack.c.b16 %v656, %v655
      %v677 = vpack.c.b16 %v658, %v657
      %v678 = vpack.c.b16 %v660, %v659
      %v679 = vpack.c.b16 %v662, %v661
      %v680 = vpack.c.b16 %v664, %v663
      %697 = vmatprep.subr.bf16.mxu0 0
      %698 = vmatpush1.bf16.msra.mxu0 %v665
      %699 = vmatprep.subr.bf16.mxu0 0
      %700 = vmatpush1.bf16.msra.mxu0 %v666
      %701 = vmatprep.subr.bf16.mxu0 0
      %702 = vmatpush1.bf16.msra.mxu0 %v667
      %703 = vmatprep.subr.bf16.mxu0 0
      %704 = vmatpush1.bf16.msra.mxu0 %v668
      %705 = vmatprep.subr.bf16.mxu0 0
      %706 = vmatpush1.bf16.msra.mxu0 %v669
      %707 = vmatprep.subr.bf16.mxu0 0
      %708 = vmatpush1.bf16.msra.mxu0 %v670
      %709 = vmatprep.subr.bf16.mxu0 0
      %710 = vmatpush1.bf16.msra.mxu0 %v671
      %711 = vmatprep.subr.bf16.mxu0 0
      %712 = vmatpush1.bf16.msra.mxu0 %v672
      %713 = vmatprep.subr.bf16.mxu0 0
      %714 = vmatpush1.bf16.msra.mxu0 %v673
      %715 = vmatprep.subr.bf16.mxu0 0
      %716 = vmatpush1.bf16.msra.mxu0 %v674
      %717 = vmatprep.subr.bf16.mxu0 0
      %718 = vmatpush1.bf16.msra.mxu0 %v675
      %719 = vmatprep.subr.bf16.mxu0 0
      %720 = vmatpush1.bf16.msra.mxu0 %v676
      %721 = vmatprep.subr.bf16.mxu0 0
      %722 = vmatpush1.bf16.msra.mxu0 %v677
      %723 = vmatprep.subr.bf16.mxu0 0
      %724 = vmatpush1.bf16.msra.mxu0 %v678
      %725 = vmatprep.subr.bf16.mxu0 0
      %726 = vmatpush1.bf16.msra.mxu0 %v679
      %727 = vmatprep.subr.bf16.mxu0 0
      %728 = vmatpush1.bf16.msra.mxu0 %v680
      %729 = vmatprep.mubr.bf16.mxu0 %v538
      %730 = vmatmul.mubr.bf16.gmra.mrb[0].mxu0 %v537
      %v731 = vpop.f32.mrb[0].mxu0
      %v732 = vadd.f32 0.0, %v731
      %v733 = vpop.f32.mrb[0].mxu0
      %v734 = vpop.f32.mrb[0].mxu0
      %v735 = vadd.f32 0.0, %v734
      %v736 = vpop.f32.mrb[0].mxu0
      %737 = vmatprep.mubr.bf16.mxu0 %v540
      %738 = vmatmul.mubr.bf16.gmra.mrb[0].mxu0 %v539
      %v739 = vpop.f32.mrb[0].mxu0
      %v740 = vadd.f32 0.0, %v739
      %v741 = vpop.f32.mrb[0].mxu0
      %v742 = vpop.f32.mrb[0].mxu0
      %v743 = vadd.f32 0.0, %v742
      %v744 = vpop.f32.mrb[0].mxu0
      %745 = vmatprep.mubr.bf16.mxu0 %v542
      %746 = vmatmul.mubr.bf16.gmra.mrb[0].mxu0 %v541
      %v747 = vpop.f32.mrb[0].mxu0
      %v748 = vadd.f32 0.0, %v747
      %v749 = vpop.f32.mrb[0].mxu0
      %v750 = vpop.f32.mrb[0].mxu0
      %v751 = vadd.f32 0.0, %v750
      %v752 = vpop.f32.mrb[0].mxu0
      %753 = vmatprep.mubr.bf16.mxu0 %v544
      %754 = vmatmul.mubr.bf16.gmra.mrb[0].mxu0 %v543
      %v755 = vpop.f32.mrb[0].mxu0
      %v756 = vadd.f32 0.0, %v755
      %v757 = vpop.f32.mrb[0].mxu0
      %v758 = vpop.f32.mrb[0].mxu0
      %v759 = vadd.f32 0.0, %v758
      %v760 = vpop.f32.mrb[0].mxu0
      %761 = vmatprep.mubr.bf16.mxu0 %v546
      %762 = vmatmul.mubr.bf16.gmra.mrb[0].mxu0 %v545
      %v763 = vpop.f32.mrb[0].mxu0
      %v764 = vadd.f32 0.0, %v763
      %v765 = vpop.f32.mrb[0].mxu0
      %v766 = vpop.f32.mrb[0].mxu0
      %v767 = vadd.f32 0.0, %v766
      %v768 = vpop.f32.mrb[0].mxu0
      %769 = vmatprep.mubr.bf16.mxu0 %v548
      %770 = vmatmul.mubr.bf16.gmra.mrb[0].mxu0 %v547
      %v771 = vpop.f32.mrb[0].mxu0
      %v772 = vadd.f32 0.0, %v771
      %v773 = vpop.f32.mrb[0].mxu0
      %v774 = vpop.f32.mrb[0].mxu0
      %v775 = vadd.f32 0.0, %v774
      %v776 = vpop.f32.mrb[0].mxu0
      %777 = vmatprep.mubr.bf16.mxu0 %v550
      %778 = vmatmul.mubr.bf16.gmra.mrb[0].mxu0 %v549
      %v779 = vpop.f32.mrb[0].mxu0
      %v780 = vadd.f32 0.0, %v779
      %v781 = vpop.f32.mrb[0].mxu0
      %v782 = vpop.f32.mrb[0].mxu0
      %v783 = vadd.f32 0.0, %v782
      %v784 = vpop.f32.mrb[0].mxu0
      %785 = vmatprep.mubr.bf16.mxu0 %v552
      %786 = vmatmul.mubr.bf16.gmra.mrb[0].mxu0 %v551
      %v787 = vpop.f32.mrb[0].mxu0
      %v788 = vadd.f32 0.0, %v787
      %v789 = vpop.f32.mrb[0].mxu0
      %v790 = vpop.f32.mrb[0].mxu0
      %v791 = vadd.f32 0.0, %v790
      %v792 = vpop.f32.mrb[0].mxu0
      %793 = vmatprep.mubr.bf16.mxu0 %v554
      %794 = vmatmul.mubr.bf16.gmra.mrb[0].mxu0 %v553
      %v795 = vpop.f32.mrb[0].mxu0
      %v796 = vadd.f32 0.0, %v795
      %v797 = vpop.f32.mrb[0].mxu0
      %v798 = vpop.f32.mrb[0].mxu0
      %v799 = vadd.f32 0.0, %v798
      %v800 = vpop.f32.mrb[0].mxu0
      %801 = vmatprep.mubr.bf16.mxu0 %v556
      %802 = vmatmul.mubr.bf16.gmra.mrb[0].mxu0 %v555
      %v803 = vpop.f32.mrb[0].mxu0
      %v804 = vadd.f32 0.0, %v803
      %v805 = vpop.f32.mrb[0].mxu0
      %v806 = vpop.f32.mrb[0].mxu0
      %v807 = vadd.f32 0.0, %v806
      %v808 = vpop.f32.mrb[0].mxu0
      %809 = vmatprep.mubr.bf16.mxu0 %v558
      %810 = vmatmul.mubr.bf16.gmra.mrb[0].mxu0 %v557
      %v811 = vpop.f32.mrb[0].mxu0
      %v812 = vadd.f32 0.0, %v811
      %v813 = vpop.f32.mrb[0].mxu0
      %v814 = vpop.f32.mrb[0].mxu0
      %v815 = vadd.f32 0.0, %v814
      %v816 = vpop.f32.mrb[0].mxu0
      %817 = vmatprep.mubr.bf16.mxu0 %v560
      %818 = vmatmul.mubr.bf16.gmra.mrb[0].mxu0 %v559
      %v819 = vpop.f32.mrb[0].mxu0
      %v820 = vadd.f32 0.0, %v819
      %v821 = vpop.f32.mrb[0].mxu0
      %v822 = vpop.f32.mrb[0].mxu0
      %v823 = vadd.f32 0.0, %v822
      %v824 = vpop.f32.mrb[0].mxu0
      %825 = vmatprep.mubr.bf16.mxu0 %v562
      %826 = vmatmul.mubr.bf16.gmra.mrb[0].mxu0 %v561
      %v827 = vpop.f32.mrb[0].mxu0
      %v828 = vadd.f32 0.0, %v827
      %v829 = vpop.f32.mrb[0].mxu0
      %v830 = vpop.f32.mrb[0].mxu0
      %v831 = vadd.f32 0.0, %v830
      %v832 = vpop.f32.mrb[0].mxu0
      %833 = vmatprep.mubr.bf16.mxu0 %v564
      %834 = vmatmul.mubr.bf16.gmra.mrb[0].mxu0 %v563
      %v835 = vpop.f32.mrb[0].mxu0
      %v836 = vadd.f32 0.0, %v835
      %v837 = vpop.f32.mrb[0].mxu0
      %v838 = vpop.f32.mrb[0].mxu0
      %v839 = vadd.f32 0.0, %v838
      %v840 = vpop.f32.mrb[0].mxu0
      %841 = vmatprep.mubr.bf16.mxu0 %v566
      %842 = vmatmul.mubr.bf16.gmra.mrb[0].mxu0 %v565
      %v843 = vpop.f32.mrb[0].mxu0
      %v844 = vadd.f32 0.0, %v843
      %v845 = vpop.f32.mrb[0].mxu0
      %v846 = vpop.f32.mrb[0].mxu0
      %v847 = vadd.f32 0.0, %v846
      %v848 = vpop.f32.mrb[0].mxu0
      %849 = vmatprep.mubr.bf16.mxu0 %v568
      %850 = vmatmul.mubr.bf16.gmra.mrb[0].mxu0 %v567
      %v851 = vpop.f32.mrb[0].mxu0
      %v852 = vadd.f32 0.0, %v851
      %v853 = vpop.f32.mrb[0].mxu0
      %v854 = vpop.f32.mrb[0].mxu0
      %v855 = vadd.f32 0.0, %v854
      %v856 = vpop.f32.mrb[0].mxu0
      %857 = vdwg.mxu0
      %v858 = vadd.f32 %v345, %v732
      %v859 = vadd.f32 %v346, %v735
      %v860 = vadd.f32 %v347, %v740
      %v861 = vadd.f32 %v348, %v743
      %v862 = vadd.f32 %v349, %v748
      %v863 = vadd.f32 %v350, %v751
      %v864 = vadd.f32 %v351, %v756
      %v865 = vadd.f32 %v352, %v759
      %v866 = vadd.f32 %v353, %v764
      %v867 = vadd.f32 %v354, %v767
      %v868 = vadd.f32 %v355, %v772
      %v869 = vadd.f32 %v356, %v775
      %v870 = vadd.f32 %v357, %v780
      %v871 = vadd.f32 %v358, %v783
      %v872 = vadd.f32 %v359, %v788
      %v873 = vadd.f32 %v360, %v791
      %v874 = vadd.f32 %v361, %v796
      %v875 = vadd.f32 %v362, %v799
      %v876 = vadd.f32 %v363, %v804
      %v877 = vadd.f32 %v364, %v807
      %v878 = vadd.f32 %v365, %v812
      %v879 = vadd.f32 %v366, %v815
      %v880 = vadd.f32 %v367, %v820
      %v881 = vadd.f32 %v368, %v823
      %v882 = vadd.f32 %v369, %v828
      %v883 = vadd.f32 %v370, %v831
      %v884 = vadd.f32 %v371, %v836
      %v885 = vadd.f32 %v372, %v839
      %v886 = vadd.f32 %v373, %v844
      %v887 = vadd.f32 %v374, %v847
      %v888 = vadd.f32 %v375, %v852
      %v889 = vadd.f32 %v376, %v855
      %890 = vst [vmem:[#allocation2] sm:$0xff] %v858
      %891 = vst [vmem:[#allocation2 + $0x8] sm:$0xff] %v859
      %892 = vst [vmem:[#allocation2 + $0x10] sm:$0xff] %v860
      %893 = vst [vmem:[#allocation2 + $0x18] sm:$0xff] %v861
      %894 = vst [vmem:[#allocation2 + $0x20] sm:$0xff] %v862
      %895 = vst [vmem:[#allocation2 + $0x28] sm:$0xff] %v863
      %896 = vst [vmem:[#allocation2 + $0x30] sm:$0xff] %v864
      %897 = vst [vmem:[#allocation2 + $0x38] sm:$0xff] %v865
      %898 = vst [vmem:[#allocation2 + $0x40] sm:$0xff] %v866
      %899 = vst [vmem:[#allocation2 + $0x48] sm:$0xff] %v867
      %900 = vst [vmem:[#allocation2 + $0x50] sm:$0xff] %v868
      %901 = vst [vmem:[#allocation2 + $0x58] sm:$0xff] %v869
      %902 = vst [vmem:[#allocation2 + $0x60] sm:$0xff] %v870
      %903 = vst [vmem:[#allocation2 + $0x68] sm:$0xff] %v871
      %904 = vst [vmem:[#allocation2 + $0x70] sm:$0xff] %v872
      %905 = vst [vmem:[#allocation2 + $0x78] sm:$0xff] %v873
      %906 = vst [vmem:[#allocation2 + $0x80] sm:$0xff] %v874
      %907 = vst [vmem:[#allocation2 + $0x88] sm:$0xff] %v875
      %908 = vst [vmem:[#allocation2 + $0x90] sm:$0xff] %v876
      %909 = vst [vmem:[#allocation2 + $0x98] sm:$0xff] %v877
      %910 = vst [vmem:[#allocation2 + $0xa0] sm:$0xff] %v878
      %911 = vst [vmem:[#allocation2 + $0xa8] sm:$0xff] %v879
      %912 = vst [vmem:[#allocation2 + $0xb0] sm:$0xff] %v880
      %913 = vst [vmem:[#allocation2 + $0xb8] sm:$0xff] %v881
      %914 = vst [vmem:[#allocation2 + $0xc0] sm:$0xff] %v882
      %915 = vst [vmem:[#allocation2 + $0xc8] sm:$0xff] %v883
      %916 = vst [vmem:[#allocation2 + $0xd0] sm:$0xff] %v884
      %917 = vst [vmem:[#allocation2 + $0xd8] sm:$0xff] %v885
      %918 = vst [vmem:[#allocation2 + $0xe0] sm:$0xff] %v886
      %919 = vst [vmem:[#allocation2 + $0xe8] sm:$0xff] %v887
      %920 = vst [vmem:[#allocation2 + $0xf0] sm:$0xff] %v888
      %921 = vst [vmem:[#allocation2 + $0xf8] sm:$0xff] %v889
      // Predicated region
      $region41: #{basic_block_forward.4} parent=35 // pred_check
        %p922 = pneg %p309
      $region42: #{basic_block_forward.4} parent=35 // pred_check_branch
        %924 = sbr.rel (%p922) target = $region44
      $region43: #{basic_block_forward.4} parent=35 // pred_region
        %v925 = vld [vmem:[#allocation2] sm:$0xff]
        %v926 = vld [vmem:[#allocation2 + $0x8] sm:$0xff]
        %v927 = vld [vmem:[#allocation2 + $0x10] sm:$0xff]
        %v928 = vld [vmem:[#allocation2 + $0x18] sm:$0xff]
        %v929 = vld [vmem:[#allocation2 + $0x20] sm:$0xff]
        %v930 = vld [vmem:[#allocation2 + $0x28] sm:$0xff]
        %v931 = vld [vmem:[#allocation2 + $0x30] sm:$0xff]
        %v932 = vld [vmem:[#allocation2 + $0x38] sm:$0xff]
        %v933 = vld [vmem:[#allocation2 + $0x40] sm:$0xff]
        %v934 = vld [vmem:[#allocation2 + $0x48] sm:$0xff]
        %v935 = vld [vmem:[#allocation2 + $0x50] sm:$0xff]
        %v936 = vld [vmem:[#allocation2 + $0x58] sm:$0xff]
        %v937 = vld [vmem:[#allocation2 + $0x60] sm:$0xff]
        %v938 = vld [vmem:[#allocation2 + $0x68] sm:$0xff]
        %v939 = vld [vmem:[#allocation2 + $0x70] sm:$0xff]
        %v940 = vld [vmem:[#allocation2 + $0x78] sm:$0xff]
        %v941 = vld [vmem:[#allocation2 + $0x80] sm:$0xff]
        %v942 = vld [vmem:[#allocation2 + $0x88] sm:$0xff]
        %v943 = vld [vmem:[#allocation2 + $0x90] sm:$0xff]
        %v944 = vld [vmem:[#allocation2 + $0x98] sm:$0xff]
        %v945 = vld [vmem:[#allocation2 + $0xa0] sm:$0xff]
        %v946 = vld [vmem:[#allocation2 + $0xa8] sm:$0xff]
        %v947 = vld [vmem:[#allocation2 + $0xb0] sm:$0xff]
        %v948 = vld [vmem:[#allocation2 + $0xb8] sm:$0xff]
        %v949 = vld [vmem:[#allocation2 + $0xc0] sm:$0xff]
        %v950 = vld [vmem:[#allocation2 + $0xc8] sm:$0xff]
        %v951 = vld [vmem:[#allocation2 + $0xd0] sm:$0xff]
        %v952 = vld [vmem:[#allocation2 + $0xd8] sm:$0xff]
        %v953 = vld [vmem:[#allocation2 + $0xe0] sm:$0xff]
        %v954 = vld [vmem:[#allocation2 + $0xe8] sm:$0xff]
        %v955 = vld [vmem:[#allocation2 + $0xf0] sm:$0xff]
        %v956 = vld [vmem:[#allocation2 + $0xf8] sm:$0xff]
        %v957 = vld [vmem:[%s295] sm:$0x1]
        %v959 = vlaneseq
        %v960 = vshrl.u32 %v959, 7
        %v961 = vsub.s32 0, %v960
        %v962 = vrot.slane %v957, %v961
        %v964 = vmul.f32 %v925, %v962
        %v965 = vmul.f32 %v926, %v962
        %v966 = vmul.f32 %v927, %v962
        %v967 = vmul.f32 %v928, %v962
        %v968 = vmul.f32 %v929, %v962
        %v969 = vmul.f32 %v930, %v962
        %v970 = vmul.f32 %v931, %v962
        %v971 = vmul.f32 %v932, %v962
        %v972 = vmul.f32 %v933, %v962
        %v973 = vmul.f32 %v934, %v962
        %v974 = vmul.f32 %v935, %v962
        %v975 = vmul.f32 %v936, %v962
        %v976 = vmul.f32 %v937, %v962
        %v977 = vmul.f32 %v938, %v962
        %v978 = vmul.f32 %v939, %v962
        %v979 = vmul.f32 %v940, %v962
        %v980 = vmul.f32 %v941, %v962
        %v981 = vmul.f32 %v942, %v962
        %v982 = vmul.f32 %v943, %v962
        %v983 = vmul.f32 %v944, %v962
        %v984 = vmul.f32 %v945, %v962
        %v985 = vmul.f32 %v946, %v962
        %v986 = vmul.f32 %v947, %v962
        %v987 = vmul.f32 %v948, %v962
        %v988 = vmul.f32 %v949, %v962
        %v989 = vmul.f32 %v950, %v962
        %v990 = vmul.f32 %v951, %v962
        %v991 = vmul.f32 %v952, %v962
        %v992 = vmul.f32 %v953, %v962
        %v993 = vmul.f32 %v954, %v962
        %v994 = vmul.f32 %v955, %v962
        %v995 = vmul.f32 %v956, %v962
        %v996 = vld [vmem:[%s298] sm:$0x1]
        %v998 = vlaneseq
        %v999 = vshrl.u32 %v998, 7
        %v1000 = vsub.s32 0, %v999
        %v1001 = vrot.slane %v996, %v1000
        %v1003 = vadd.f32 %v964, %v1001
        %v1004 = vadd.f32 %v965, %v1001
        %v1005 = vadd.f32 %v966, %v1001
        %v1006 = vadd.f32 %v967, %v1001
        %v1007 = vadd.f32 %v968, %v1001
        %v1008 = vadd.f32 %v969, %v1001
        %v1009 = vadd.f32 %v970, %v1001
        %v1010 = vadd.f32 %v971, %v1001
        %v1011 = vadd.f32 %v972, %v1001
        %v1012 = vadd.f32 %v973, %v1001
        %v1013 = vadd.f32 %v974, %v1001
        %v1014 = vadd.f32 %v975, %v1001
        %v1015 = vadd.f32 %v976, %v1001
        %v1016 = vadd.f32 %v977, %v1001
        %v1017 = vadd.f32 %v978, %v1001
        %v1018 = vadd.f32 %v979, %v1001
        %v1019 = vadd.f32 %v980, %v1001
        %v1020 = vadd.f32 %v981, %v1001
        %v1021 = vadd.f32 %v982, %v1001
        %v1022 = vadd.f32 %v983, %v1001
        %v1023 = vadd.f32 %v984, %v1001
        %v1024 = vadd.f32 %v985, %v1001
        %v1025 = vadd.f32 %v986, %v1001
        %v1026 = vadd.f32 %v987, %v1001
        %v1027 = vadd.f32 %v988, %v1001
        %v1028 = vadd.f32 %v989, %v1001
        %v1029 = vadd.f32 %v990, %v1001
        %v1030 = vadd.f32 %v991, %v1001
        %v1031 = vadd.f32 %v992, %v1001
        %v1032 = vadd.f32 %v993, %v1001
        %v1033 = vadd.f32 %v994, %v1001
        %v1034 = vadd.f32 %v995, %v1001
        %v1035 = vmax.f32 %v1003, 0.0
        %v1036 = vmax.f32 %v1004, 0.0
        %v1037 = vmax.f32 %v1005, 0.0
        %v1038 = vmax.f32 %v1006, 0.0
        %v1039 = vmax.f32 %v1007, 0.0
        %v1040 = vmax.f32 %v1008, 0.0
        %v1041 = vmax.f32 %v1009, 0.0
        %v1042 = vmax.f32 %v1010, 0.0
        %v1043 = vmax.f32 %v1011, 0.0
        %v1044 = vmax.f32 %v1012, 0.0
        %v1045 = vmax.f32 %v1013, 0.0
        %v1046 = vmax.f32 %v1014, 0.0
        %v1047 = vmax.f32 %v1015, 0.0
        %v1048 = vmax.f32 %v1016, 0.0
        %v1049 = vmax.f32 %v1017, 0.0
        %v1050 = vmax.f32 %v1018, 0.0
        %v1051 = vmax.f32 %v1019, 0.0
        %v1052 = vmax.f32 %v1020, 0.0
        %v1053 = vmax.f32 %v1021, 0.0
        %v1054 = vmax.f32 %v1022, 0.0
        %v1055 = vmax.f32 %v1023, 0.0
        %v1056 = vmax.f32 %v1024, 0.0
        %v1057 = vmax.f32 %v1025, 0.0
        %v1058 = vmax.f32 %v1026, 0.0
        %v1059 = vmax.f32 %v1027, 0.0
        %v1060 = vmax.f32 %v1028, 0.0
        %v1061 = vmax.f32 %v1029, 0.0
        %v1062 = vmax.f32 %v1030, 0.0
        %v1063 = vmax.f32 %v1031, 0.0
        %v1064 = vmax.f32 %v1032, 0.0
        %v1065 = vmax.f32 %v1033, 0.0
        %v1066 = vmax.f32 %v1034, 0.0
        %v1067 = vpack.c.bf16 %v1036, %v1035
        %v1068 = vpack.c.bf16 %v1038, %v1037
        %v1069 = vpack.c.bf16 %v1040, %v1039
        %v1070 = vpack.c.bf16 %v1042, %v1041
        %v1071 = vpack.c.bf16 %v1044, %v1043
        %v1072 = vpack.c.bf16 %v1046, %v1045
        %v1073 = vpack.c.bf16 %v1048, %v1047
        %v1074 = vpack.c.bf16 %v1050, %v1049
        %v1075 = vpack.c.bf16 %v1052, %v1051
        %v1076 = vpack.c.bf16 %v1054, %v1053
        %v1077 = vpack.c.bf16 %v1056, %v1055
        %v1078 = vpack.c.bf16 %v1058, %v1057
        %v1079 = vpack.c.bf16 %v1060, %v1059
        %v1080 = vpack.c.bf16 %v1062, %v1061
        %v1081 = vpack.c.bf16 %v1064, %v1063
        %v1082 = vpack.c.bf16 %v1066, %v1065
        %v1099 = vunpack.c.l.b16 %v1067
        %v1100 = vunpack.c.h.b16 %v1067
        %v1101 = vunpack.c.l.b16 %v1068
        %v1102 = vunpack.c.h.b16 %v1068
        %v1103 = vunpack.c.l.b16 %v1069
        %v1104 = vunpack.c.h.b16 %v1069
        %v1105 = vunpack.c.l.b16 %v1070
        %v1106 = vunpack.c.h.b16 %v1070
        %v1107 = vunpack.c.l.b16 %v1071
        %v1108 = vunpack.c.h.b16 %v1071
        %v1109 = vunpack.c.l.b16 %v1072
        %v1110 = vunpack.c.h.b16 %v1072
        %v1111 = vunpack.c.l.b16 %v1073
        %v1112 = vunpack.c.h.b16 %v1073
        %v1113 = vunpack.c.l.b16 %v1074
        %v1114 = vunpack.c.h.b16 %v1074
        %v1115 = vunpack.c.l.b16 %v1075
        %v1116 = vunpack.c.h.b16 %v1075
        %v1117 = vunpack.c.l.b16 %v1076
        %v1118 = vunpack.c.h.b16 %v1076
        %v1119 = vunpack.c.l.b16 %v1077
        %v1120 = vunpack.c.h.b16 %v1077
        %v1121 = vunpack.c.l.b16 %v1078
        %v1122 = vunpack.c.h.b16 %v1078
        %v1123 = vunpack.c.l.b16 %v1079
        %v1124 = vunpack.c.h.b16 %v1079
        %v1125 = vunpack.c.l.b16 %v1080
        %v1126 = vunpack.c.h.b16 %v1080
        %v1127 = vunpack.c.l.b16 %v1081
        %v1128 = vunpack.c.h.b16 %v1081
        %v1129 = vunpack.c.l.b16 %v1082
        %v1130 = vunpack.c.h.b16 %v1082
        %v1131 = vpack.c.b16 %v1099, %v1099
        %v1132 = vpack.c.b16 %v1100, %v1100
        %v1133 = vpack.c.b16 %v1101, %v1101
        %v1134 = vpack.c.b16 %v1102, %v1102
        %v1135 = vpack.c.b16 %v1103, %v1103
        %v1136 = vpack.c.b16 %v1104, %v1104
        %v1137 = vpack.c.b16 %v1105, %v1105
        %v1138 = vpack.c.b16 %v1106, %v1106
        %v1139 = vpack.c.b16 %v1107, %v1107
        %v1140 = vpack.c.b16 %v1108, %v1108
        %v1141 = vpack.c.b16 %v1109, %v1109
        %v1142 = vpack.c.b16 %v1110, %v1110
        %v1143 = vpack.c.b16 %v1111, %v1111
        %v1144 = vpack.c.b16 %v1112, %v1112
        %v1145 = vpack.c.b16 %v1113, %v1113
        %v1146 = vpack.c.b16 %v1114, %v1114
        %v1147 = vpack.c.b16 %v1115, %v1115
        %v1148 = vpack.c.b16 %v1116, %v1116
        %v1149 = vpack.c.b16 %v1117, %v1117
        %v1150 = vpack.c.b16 %v1118, %v1118
        %v1151 = vpack.c.b16 %v1119, %v1119
        %v1152 = vpack.c.b16 %v1120, %v1120
        %v1153 = vpack.c.b16 %v1121, %v1121
        %v1154 = vpack.c.b16 %v1122, %v1122
        %v1155 = vpack.c.b16 %v1123, %v1123
        %v1156 = vpack.c.b16 %v1124, %v1124
        %v1157 = vpack.c.b16 %v1125, %v1125
        %v1158 = vpack.c.b16 %v1126, %v1126
        %v1159 = vpack.c.b16 %v1127, %v1127
        %v1160 = vpack.c.b16 %v1128, %v1128
        %v1161 = vpack.c.b16 %v1129, %v1129
        %v1162 = vpack.c.b16 %v1130, %v1130
        %1195 = vst [vmem:[%s306] sm:$0xf] %v1131
        %1196 = vst [vmem:[%s306 + $0x4] sm:$0xf] %v1132
        %1197 = vst [vmem:[%s306 + $0x8] sm:$0xf] %v1133
        %1198 = vst [vmem:[%s306 + $0xc] sm:$0xf] %v1134
        %1199 = vst [vmem:[%s306 + $0x10] sm:$0xf] %v1135
        %1200 = vst [vmem:[%s306 + $0x14] sm:$0xf] %v1136
        %1201 = vst [vmem:[%s306 + $0x18] sm:$0xf] %v1137
        %1202 = vst [vmem:[%s306 + $0x1c] sm:$0xf] %v1138
        %1203 = vst [vmem:[%s306 + $0x20] sm:$0xf] %v1139
        %1204 = vst [vmem:[%s306 + $0x24] sm:$0xf] %v1140
        %1205 = vst [vmem:[%s306 + $0x28] sm:$0xf] %v1141
        %1206 = vst [vmem:[%s306 + $0x2c] sm:$0xf] %v1142
        %1207 = vst [vmem:[%s306 + $0x30] sm:$0xf] %v1143
        %1208 = vst [vmem:[%s306 + $0x34] sm:$0xf] %v1144
        %1209 = vst [vmem:[%s306 + $0x38] sm:$0xf] %v1145
        %1210 = vst [vmem:[%s306 + $0x3c] sm:$0xf] %v1146
        %1211 = vst [vmem:[%s306 + $0x40] sm:$0xf] %v1147
        %1212 = vst [vmem:[%s306 + $0x44] sm:$0xf] %v1148
        %1213 = vst [vmem:[%s306 + $0x48] sm:$0xf] %v1149
        %1214 = vst [vmem:[%s306 + $0x4c] sm:$0xf] %v1150
        %1215 = vst [vmem:[%s306 + $0x50] sm:$0xf] %v1151
        %1216 = vst [vmem:[%s306 + $0x54] sm:$0xf] %v1152
        %1217 = vst [vmem:[%s306 + $0x58] sm:$0xf] %v1153
        %1218 = vst [vmem:[%s306 + $0x5c] sm:$0xf] %v1154
        %1219 = vst [vmem:[%s306 + $0x60] sm:$0xf] %v1155
        %1220 = vst [vmem:[%s306 + $0x64] sm:$0xf] %v1156
        %1221 = vst [vmem:[%s306 + $0x68] sm:$0xf] %v1157
        %1222 = vst [vmem:[%s306 + $0x6c] sm:$0xf] %v1158
        %1223 = vst [vmem:[%s306 + $0x70] sm:$0xf] %v1159
        %1224 = vst [vmem:[%s306 + $0x74] sm:$0xf] %v1160
        %1225 = vst [vmem:[%s306 + $0x78] sm:$0xf] %v1161
        %1226 = vst [vmem:[%s306 + $0x7c] sm:$0xf] %v1162
      $region44: #{basic_block_forward.4} parent=35 // pred_fallthru
        _
      %s1227 = smul.u32 32, %s20
      %p1228 = scmp.lt.s32.totalorder %s1227, 63
      %s1229 = scalar_select %p1228, %s1227, 63
      %p1230 = scmp.lt.s32.totalorder %s21, 0
      %s1231 = scalar_select %p1230, %s21, 0
      %s1232 = sadd.s32 %s1231, %s1229
      %s1233 = smul.addr %s1232, 4
      %s1234 = scalar_lea.vmem %s4, %s1233
      // Predicated region
      $region45: #{basic_block_forward.4} parent=35 // pred_check
        %p1235 = pneg %p162
      $region46: #{basic_block_forward.4} parent=35 // pred_check_branch
        %1237 = sbr.rel (%p1235) target = $region48
      $region47: #{basic_block_forward.4} parent=35 // pred_region
        %s1238 = smul.u32 32, %s20
      $region48: #{basic_block_forward.4} parent=35 // pred_fallthru
        _
    $region36: #{basic_block_forward.4} parent=5 // pred_fallthru
      _
    %p1239 = scmp.le.s32.totalorder 2, %s10
    // Predicated region
    $region49: #{basic_block_forward.4} parent=5 // pred_check
      %p1240 = pneg %p1239
    $region50: #{basic_block_forward.4} parent=5 // pred_check_branch
      %1242 = sbr.rel (%p1240) target = $region52
    $region51: #{basic_block_forward.4} parent=5 // pred_region
      %s1243 = ssub.s32 %s10, 2
      // Predicated region
      $region53: #{basic_block_forward.4} parent=51 // pred_check
        %p1244 = pneg %p168
      $region54: #{basic_block_forward.4} parent=51 // pred_check_branch
        %1246 = sbr.rel (%p1244) target = $region56
      $region55: #{basic_block_forward.4} parent=51 // pred_region
        %s1247 = smul.u32 32, %s23
        %p1248 = scmp.lt.s32.totalorder %s1247, 63
        %s1249 = scalar_select %p1248, %s1247, 63
        %p1250 = scmp.lt.s32.totalorder %s24, 0
        %s1251 = scalar_select %p1250, %s24, 0
        %s1252 = sadd.s32 %s1251, %s1249
        %s1253 = smul.addr %s1252, 4
        %s1254 = scalar_lea.vmem %s4, %s1253
      $region56: #{basic_block_forward.4} parent=51 // pred_fallthru
        _
    $region52: #{basic_block_forward.4} parent=5 // pred_fallthru
      _
  $region6: #{basic_block_forward.4} parent=0 // loop_footer
    %s14 = sadd.s32 1, %s10
  $region7: #{basic_block_forward.4} parent=0 // loop_footer_branch
    %9 = sbr.rel target = $region3
  $region8: #{basic_block_forward.4} parent=0 // loop_exit
    _

// kernel: basic_block_forward.5
$region0: #{basic_block_forward.5}
  #allocation0 [shape = 'u32[]', space=smem, size = 0x4, offset = 0x4, fixed_abs, tag = 'smem constant byte address 0x4 - core index']
  #allocation1 [shape = 'u32[144,128]{1,0:T(1,128)}', space=vmem, size = 0x12000, scoped, tag = 'internal scratch']
  #allocation2 [shape = 'f32[256,128]{1,0:T(8,128)}', space=vmem, size = 0x20000, scoped, tag = 'scratch operand']
  %s0 = inlined_call_operand.vmem [shape: bf16[512,256], index: 0, kind: input, shape index: {}]
  %s1 = inlined_call_operand.vmem [shape: bf16[256,128], index: 1, kind: input, shape index: {}]
  %s2 = inlined_call_operand.vmem [shape: f32[512,128], index: 2, kind: input, shape index: {}]
  %s3 = inlined_call_operand.vmem [shape: f32[512,128], index: 3, kind: output, shape index: {}]
  %s4 = sld [smem:[#allocation0]]
  $region53: #{basic_block_forward.5} parent=0
    _
  %s6 = ssub.s32 1, %s4
  %s7 = scalar_select 0, %s6, %s4
  loop: start=0, step=1, limit=4
  $region2: #{basic_block_forward.5} parent=0 // loop_pre_header
    _
  $region3: #{basic_block_forward.5} parent=0 // loop_header
    %s9 = sphi 0, %s13
    %p10 = scmp.ge.s32.totalorder %s9, 4
    %s16 = sphi 0, %s35
    %s17 = sphi 0, %s31
    %s18 = sphi 0, %s27
    %s19 = sphi 0, %s16
    %s20 = sphi 0, %s17
    %s21 = sphi 0, %s18
    %s22 = sphi 0, %s19
    %s23 = sphi 0, %s20
    %s24 = sphi 0, %s21
    %s40 = sphi 0, %s42
    %s43 = sphi 0, %s40
    %s44 = sphi 0, %s43
    %s60 = sphi 0, %s44
    %s68 = sphi 0, %s70
    %s71 = sphi 0, %s68
    %s72 = sphi 0, %s71
    %s88 = sphi 0, %s72
    %s96 = sphi 0, %s98
    %s99 = sphi 0, %s96
    %s100 = sphi 0, %s99
    %s116 = sphi 0, %s100
    %s124 = sphi 0, %s126
    %s127 = sphi 0, %s124
    %s128 = sphi 0, %s127
    %s144 = sphi 0, %s128
  $region4: #{basic_block_forward.5} parent=0 // loop_header_branch
    %12 = sbr.rel (%p10) target = $region8
  $region5: #{basic_block_forward.5} parent=0 // loop_body
    %s14 = ssub.s32 %s9, 1
    %s15 = ssub.s32 %s9, 2
    %s25 = sadd.s32 1, %s18
    %p26 = scmp.ge.s32.totalorder %s25, 1
    %s27 = scalar_select %p26, 0, %s25
    %s28 = sadd.s32 1, %s17
    %s29 = scalar_select %p26, %s28, %s17
    %p30 = scmp.ge.s32.totalorder %s29, 1
    %s31 = scalar_select %p30, 0, %s29
    %s32 = sadd.s32 1, %s16
    %s33 = scalar_select %p30, %s32, %s16
    %p34 = scmp.ge.s32.totalorder %s33, 2
    %s35 = scalar_select %p34, 0, %s33
    %s36 = ssub.s32 %s16, %s35
    %s37 = ssub.s32 %s18, %s27
    %s38 = sor.u32 %s36, %s37
    %p39 = scmp.eq.s32.totalorder %s38, 0
    %s41 = sadd.s32 %s40, 1
    %s42 = scalar_select %p39, %s40, %s41
    %p45 = pneg %p39
    %p46 = scmp.eq.s32.totalorder %s9, 1
    %p47 = por %p45, %p46
    %p48 = scmp.ne.s32.totalorder %s40, %s43
    %p49 = scmp.eq.s32.totalorder %s9, 0
    %p50 = por %p48, %p49
    %p51 = scmp.ne.s32.totalorder %s40, %s43
    %p52 = scmp.eq.s32.totalorder %s14, 1
    %p53 = por %p51, %p52
    %p54 = scmp.ne.s32.totalorder %s43, %s44
    %p55 = scmp.eq.s32.totalorder %s14, 0
    %p56 = por %p54, %p55
    %p57 = scmp.ne.s32.totalorder %s43, %s44
    %p58 = scmp.eq.s32.totalorder %s15, 1
    %p59 = por %p57, %p58
    %p61 = scmp.ne.s32.totalorder %s44, %s60
    %p62 = scmp.eq.s32.totalorder %s15, 0
    %p63 = por %p61, %p62
    %s64 = ssub.s32 %s18, %s27
    %s65 = ssub.s32 %s17, %s31
    %s66 = sor.u32 %s64, %s65
    %p67 = scmp.eq.s32.totalorder %s66, 0
    %s69 = sadd.s32 %s68, 1
    %s70 = scalar_select %p67, %s68, %s69
    %p73 = pneg %p67
    %p74 = scmp.eq.s32.totalorder %s9, 1
    %p75 = por %p73, %p74
    %p76 = scmp.ne.s32.totalorder %s68, %s71
    %p77 = scmp.eq.s32.totalorder %s9, 0
    %p78 = por %p76, %p77
    %p79 = scmp.ne.s32.totalorder %s68, %s71
    %p80 = scmp.eq.s32.totalorder %s14, 1
    %p81 = por %p79, %p80
    %p82 = scmp.ne.s32.totalorder %s71, %s72
    %p83 = scmp.eq.s32.totalorder %s14, 0
    %p84 = por %p82, %p83
    %p85 = scmp.ne.s32.totalorder %s71, %s72
    %p86 = scmp.eq.s32.totalorder %s15, 1
    %p87 = por %p85, %p86
    %p89 = scmp.ne.s32.totalorder %s72, %s88
    %p90 = scmp.eq.s32.totalorder %s15, 0
    %p91 = por %p89, %p90
    %s92 = ssub.s32 %s16, %s35
    %s93 = ssub.s32 %s17, %s31
    %s94 = sor.u32 %s92, %s93
    %p95 = scmp.eq.s32.totalorder %s94, 0
    %s97 = sadd.s32 %s96, 1
    %s98 = scalar_select %p95, %s96, %s97
    %p101 = pneg %p95
    %p102 = scmp.eq.s32.totalorder %s9, 1
    %p103 = por %p101, %p102
    %p104 = scmp.ne.s32.totalorder %s96, %s99
    %p105 = scmp.eq.s32.totalorder %s9, 0
    %p106 = por %p104, %p105
    %p107 = scmp.ne.s32.totalorder %s96, %s99
    %p108 = scmp.eq.s32.totalorder %s14, 1
    %p109 = por %p107, %p108
    %p110 = scmp.ne.s32.totalorder %s99, %s100
    %p111 = scmp.eq.s32.totalorder %s14, 0
    %p112 = por %p110, %p111
    %p113 = scmp.ne.s32.totalorder %s99, %s100
    %p114 = scmp.eq.s32.totalorder %s15, 1
    %p115 = por %p113, %p114
    %p117 = scmp.ne.s32.totalorder %s100, %s116
    %p118 = scmp.eq.s32.totalorder %s15, 0
    %p119 = por %p117, %p118
    %s120 = ssub.s32 %s16, %s35
    %s121 = ssub.s32 %s17, %s31
    %s122 = sor.u32 %s120, %s121
    %p123 = scmp.eq.s32.totalorder %s122, 0
    %s125 = sadd.s32 %s124, 1
    %s126 = scalar_select %p123, %s124, %s125
    %p129 = pneg %p123
    %p130 = scmp.eq.s32.totalorder %s9, 1
    %p131 = por %p129, %p130
    %p132 = scmp.ne.s32.totalorder %s124, %s127
    %p133 = scmp.eq.s32.totalorder %s9, 0
    %p134 = por %p132, %p133
    %p135 = scmp.ne.s32.totalorder %s124, %s127
    %p136 = scmp.eq.s32.totalorder %s14, 1
    %p137 = por %p135, %p136
    %p138 = scmp.ne.s32.totalorder %s127, %s128
    %p139 = scmp.eq.s32.totalorder %s14, 0
    %p140 = por %p138, %p139
    %p141 = scmp.ne.s32.totalorder %s127, %s128
    %p142 = scmp.eq.s32.totalorder %s15, 1
    %p143 = por %p141, %p142
    %p145 = scmp.ne.s32.totalorder %s128, %s144
    %p146 = scmp.eq.s32.totalorder %s15, 0
    %p147 = por %p145, %p146
    %p148 = scmp.le.s32.totalorder 1, %s9
    %p149 = scmp.lt.s32.totalorder %s9, 3
    %p150 = pnand %p148, %p149
    %p151 = pneg %p150
    // Predicated region
    $region9: #{basic_block_forward.5} parent=5 // pred_check
      _
    $region10: #{basic_block_forward.5} parent=5 // pred_check_branch
      %153 = sbr.rel (%p150) target = $region12
    $region11: #{basic_block_forward.5} parent=5 // pred_region
      %s154 = ssub.s32 %s9, 1
      // Predicated region
      $region13: #{basic_block_forward.5} parent=11 // pred_check
        %p155 = pneg %p84
      $region14: #{basic_block_forward.5} parent=11 // pred_check_branch
        %157 = sbr.rel (%p155) target = $region16
      $region15: #{basic_block_forward.5} parent=11 // pred_region
        %s158 = smul.u32 32, %s21
        %p159 = scmp.lt.s32.totalorder %s158, 31
        %s160 = scalar_select %p159, %s158, 31
        %p161 = scmp.lt.s32.totalorder %s20, 0
        %s162 = scalar_select %p161, %s20, 0
        %s163 = sadd.s32 %s162, %s160
        %s164 = smul.addr %s163, 4
        %s165 = scalar_lea.vmem %s1, %s164
        %s166 = smul.u32 32, %s21
      $region16: #{basic_block_forward.5} parent=11 // pred_fallthru
        _
    $region12: #{basic_block_forward.5} parent=5 // pred_fallthru
      _
    %p167 = scmp.lt.s32.totalorder %s9, 2
    // Predicated region
    $region17: #{basic_block_forward.5} parent=5 // pred_check
      %p168 = pneg %p167
    $region18: #{basic_block_forward.5} parent=5 // pred_check_branch
      %170 = sbr.rel (%p168) target = $region20
    $region19: #{basic_block_forward.5} parent=5 // pred_region
      // Predicated region
      $region21: #{basic_block_forward.5} parent=19 // pred_check
        %p171 = pneg %p50
      $region22: #{basic_block_forward.5} parent=19 // pred_check_branch
        %173 = sbr.rel (%p171) target = $region24
      $region23: #{basic_block_forward.5} parent=19 // pred_region
        %s174 = smul.u32 32, %s16
        %s175 = smul.u32 2, %s18
        %p176 = scmp.lt.s32.totalorder %s174, 63
        %s177 = scalar_select %p176, %s174, 63
        %p178 = scmp.lt.s32.totalorder %s175, 1
        %s179 = scalar_select %p178, %s175, 1
        %s180 = smul.addr %s177, 2
        %s181 = sadd.s32 %s179, %s180
        %s182 = smul.addr %s181, 4
        %s183 = scalar_lea.vmem %s0, %s182
        %s184 = smul.u32 32, %s16
        %s185 = smul.u32 2, %s18
      $region24: #{basic_block_forward.5} parent=19 // pred_fallthru
        _
      // Predicated region
      $region25: #{basic_block_forward.5} parent=19 // pred_check
        %p186 = pneg %p106
      $region26: #{basic_block_forward.5} parent=19 // pred_check_branch
        %188 = sbr.rel (%p186) target = $region28
      $region27: #{basic_block_forward.5} parent=19 // pred_region
        %s189 = smul.u32 32, %s16
        %p190 = scmp.lt.s32.totalorder %s189, 63
        %s191 = scalar_select %p190, %s189, 63
        %p192 = scmp.lt.s32.totalorder %s17, 0
        %s193 = scalar_select %p192, %s17, 0
        %s194 = sadd.s32 %s193, %s191
        %s195 = smul.addr %s194, 8
        %s196 = scalar_lea.vmem %s2, %s195
        %s197 = smul.u32 32, %s16
      $region28: #{basic_block_forward.5} parent=19 // pred_fallthru
        _
    $region20: #{basic_block_forward.5} parent=5 // pred_fallthru
      _
    %p198 = scmp.le.s32.totalorder 1, %s9
    %p199 = scmp.lt.s32.totalorder %s9, 3
    %p200 = pnand %p198, %p199
    %p201 = pneg %p200
    // Predicated region
    $region29: #{basic_block_forward.5} parent=5 // pred_check
      _
    $region30: #{basic_block_forward.5} parent=5 // pred_check_branch
      %203 = sbr.rel (%p200) target = $region32
    $region31: #{basic_block_forward.5} parent=5 // pred_region
      %s204 = ssub.s32 %s9, 1
      %s205 = smul.u32 32, %s19
      %s206 = smul.u32 2, %s21
      %p207 = scmp.lt.s32.totalorder %s205, 63
      %s208 = scalar_select %p207, %s205, 63
      %p209 = scmp.lt.s32.totalorder %s206, 1
      %s210 = scalar_select %p209, %s206, 1
      %s211 = smul.addr %s208, 2
      %s212 = sadd.s32 %s210, %s211
      %s213 = smul.addr %s212, 4
      %s214 = scalar_lea.vmem %s0, %s213
      %p215 = pneg %p56
      %p216 = pneg %p53
      %s217 = smul.u32 32, %s21
      %p218 = scmp.lt.s32.totalorder %s217, 31
      %s219 = scalar_select %p218, %s217, 31
      %p220 = scmp.lt.s32.totalorder %s20, 0
      %s221 = scalar_select %p220, %s20, 0
      %s222 = sadd.s32 %s221, %s219
      %s223 = smul.addr %s222, 4
      %s224 = scalar_lea.vmem %s1, %s223
      %p225 = pneg %p84
      %p226 = pneg %p81
      %s227 = smul.u32 32, %s19
      %p228 = scmp.lt.s32.totalorder %s227, 63
      %s229 = scalar_select %p228, %s227, 63
      %p230 = scmp.lt.s32.totalorder %s20, 0
      %s231 = scalar_select %p230, %s20, 0
      %s232 = sadd.s32 %s231, %s229
      %s233 = smul.addr %s232, 8
      %s234 = scalar_lea.vmem %s2, %s233
      %p235 = pneg %p112
      %p236 = pneg %p109
      %p237 = pneg %p140
      %p238 = pneg %p137
      %s239 = smul.u32 32, %s19
      %p240 = scmp.lt.s32.totalorder %s239, 63
      %s241 = scalar_select %p240, %s239, 63
      %p242 = scmp.lt.s32.totalorder %s20, 0
      %s243 = scalar_select %p242, %s20, 0
      %s244 = sadd.s32 %s243, %s241
      %s245 = smul.addr %s244, 8
      %s246 = scalar_lea.vmem %s3, %s245
      %s247 = smul.u32 32, %s19
      %s248 = smul.u32 2, %s21
      %p249 = scmp.lt.s32.totalorder %s247, 63
      %s250 = scalar_select %p249, %s247, 63
      %p251 = scmp.lt.s32.totalorder %s248, 1
      %s252 = scalar_select %p251, %s248, 1
      %s253 = smul.addr %s250, 2
      %s254 = sadd.s32 %s252, %s253
      %s255 = smul.addr %s254, 4
      %s256 = scalar_lea.vmem %s0, %s255
      %s257 = smul.u32 32, %s19
      %s258 = smul.u32 2, %s21
      %s259 = smul.u32 32, %s21
      %p260 = scmp.lt.s32.totalorder %s259, 31
      %s261 = scalar_select %p260, %s259, 31
      %p262 = scmp.lt.s32.totalorder %s20, 0
      %s263 = scalar_select %p262, %s20, 0
      %s264 = sadd.s32 %s263, %s261
      %s265 = smul.addr %s264, 4
      %s266 = scalar_lea.vmem %s1, %s265
      %s267 = smul.u32 32, %s21
      %s268 = smul.u32 32, %s19
      %p269 = scmp.lt.s32.totalorder %s268, 63
      %s270 = scalar_select %p269, %s268, 63
      %p271 = scmp.lt.s32.totalorder %s20, 0
      %s272 = scalar_select %p271, %s20, 0
      %s273 = sadd.s32 %s272, %s270
      %s274 = smul.addr %s273, 8
      %s275 = scalar_lea.vmem %s2, %s274
      %s276 = smul.u32 32, %s19
      %s277 = smul.u32 32, %s19
      %p278 = scmp.lt.s32.totalorder %s277, 63
      %s279 = scalar_select %p278, %s277, 63
      %p280 = scmp.lt.s32.totalorder %s20, 0
      %s281 = scalar_select %p280, %s20, 0
      %s282 = sadd.s32 %s281, %s279
      %s283 = smul.addr %s282, 8
      %s284 = scalar_lea.vmem %s3, %s283
      %s285 = smul.u32 32, %s19
      %p287 = scmp.eq.s32.totalorder %s21, 0
      // Predicated region
      $region33: #{basic_block_forward.5} parent=31 // pred_check
        %p288 = pneg %p287
      $region34: #{basic_block_forward.5} parent=31 // pred_check_branch
        %290 = sbr.rel (%p288) target = $region36
      $region35: #{basic_block_forward.5} parent=31 // pred_region
        %291 = vst [vmem:[#allocation2] sm:$0xff] 0.0
        %292 = vst [vmem:[#allocation2 + $0x8] sm:$0xff] 0.0
        %293 = vst [vmem:[#allocation2 + $0x10] sm:$0xff] 0.0
        %294 = vst [vmem:[#allocation2 + $0x18] sm:$0xff] 0.0
        %295 = vst [vmem:[#allocation2 + $0x20] sm:$0xff] 0.0
        %296 = vst [vmem:[#allocation2 + $0x28] sm:$0xff] 0.0
        %297 = vst [vmem:[#allocation2 + $0x30] sm:$0xff] 0.0
        %298 = vst [vmem:[#allocation2 + $0x38] sm:$0xff] 0.0
        %299 = vst [vmem:[#allocation2 + $0x40] sm:$0xff] 0.0
        %300 = vst [vmem:[#allocation2 + $0x48] sm:$0xff] 0.0
        %301 = vst [vmem:[#allocation2 + $0x50] sm:$0xff] 0.0
        %302 = vst [vmem:[#allocation2 + $0x58] sm:$0xff] 0.0
        %303 = vst [vmem:[#allocation2 + $0x60] sm:$0xff] 0.0
        %304 = vst [vmem:[#allocation2 + $0x68] sm:$0xff] 0.0
        %305 = vst [vmem:[#allocation2 + $0x70] sm:$0xff] 0.0
        %306 = vst [vmem:[#allocation2 + $0x78] sm:$0xff] 0.0
        %307 = vst [vmem:[#allocation2 + $0x80] sm:$0xff] 0.0
        %308 = vst [vmem:[#allocation2 + $0x88] sm:$0xff] 0.0
        %309 = vst [vmem:[#allocation2 + $0x90] sm:$0xff] 0.0
        %310 = vst [vmem:[#allocation2 + $0x98] sm:$0xff] 0.0
        %311 = vst [vmem:[#allocation2 + $0xa0] sm:$0xff] 0.0
        %312 = vst [vmem:[#allocation2 + $0xa8] sm:$0xff] 0.0
        %313 = vst [vmem:[#allocation2 + $0xb0] sm:$0xff] 0.0
        %314 = vst [vmem:[#allocation2 + $0xb8] sm:$0xff] 0.0
        %315 = vst [vmem:[#allocation2 + $0xc0] sm:$0xff] 0.0
        %316 = vst [vmem:[#allocation2 + $0xc8] sm:$0xff] 0.0
        %317 = vst [vmem:[#allocation2 + $0xd0] sm:$0xff] 0.0
        %318 = vst [vmem:[#allocation2 + $0xd8] sm:$0xff] 0.0
        %319 = vst [vmem:[#allocation2 + $0xe0] sm:$0xff] 0.0
        %320 = vst [vmem:[#allocation2 + $0xe8] sm:$0xff] 0.0
        %321 = vst [vmem:[#allocation2 + $0xf0] sm:$0xff] 0.0
        %322 = vst [vmem:[#allocation2 + $0xf8] sm:$0xff] 0.0
      $region36: #{basic_block_forward.5} parent=31 // pred_fallthru
        _
      %v323 = vld [vmem:[#allocation2] sm:$0xff]
      %v324 = vld [vmem:[#allocation2 + $0x8] sm:$0xff]
      %v325 = vld [vmem:[#allocation2 + $0x10] sm:$0xff]
      %v326 = vld [vmem:[#allocation2 + $0x18] sm:$0xff]
      %v327 = vld [vmem:[#allocation2 + $0x20] sm:$0xff]
      %v328 = vld [vmem:[#allocation2 + $0x28] sm:$0xff]
      %v329 = vld [vmem:[#allocation2 + $0x30] sm:$0xff]
      %v330 = vld [vmem:[#allocation2 + $0x38] sm:$0xff]
      %v331 = vld [vmem:[#allocation2 + $0x40] sm:$0xff]
      %v332 = vld [vmem:[#allocation2 + $0x48] sm:$0xff]
      %v333 = vld [vmem:[#allocation2 + $0x50] sm:$0xff]
      %v334 = vld [vmem:[#allocation2 + $0x58] sm:$0xff]
      %v335 = vld [vmem:[#allocation2 + $0x60] sm:$0xff]
      %v336 = vld [vmem:[#allocation2 + $0x68] sm:$0xff]
      %v337 = vld [vmem:[#allocation2 + $0x70] sm:$0xff]
      %v338 = vld [vmem:[#allocation2 + $0x78] sm:$0xff]
      %v339 = vld [vmem:[#allocation2 + $0x80] sm:$0xff]
      %v340 = vld [vmem:[#allocation2 + $0x88] sm:$0xff]
      %v341 = vld [vmem:[#allocation2 + $0x90] sm:$0xff]
      %v342 = vld [vmem:[#allocation2 + $0x98] sm:$0xff]
      %v343 = vld [vmem:[#allocation2 + $0xa0] sm:$0xff]
      %v344 = vld [vmem:[#allocation2 + $0xa8] sm:$0xff]
      %v345 = vld [vmem:[#allocation2 + $0xb0] sm:$0xff]
      %v346 = vld [vmem:[#allocation2 + $0xb8] sm:$0xff]
      %v347 = vld [vmem:[#allocation2 + $0xc0] sm:$0xff]
      %v348 = vld [vmem:[#allocation2 + $0xc8] sm:$0xff]
      %v349 = vld [vmem:[#allocation2 + $0xd0] sm:$0xff]
      %v350 = vld [vmem:[#allocation2 + $0xd8] sm:$0xff]
      %v351 = vld [vmem:[#allocation2 + $0xe0] sm:$0xff]
      %v352 = vld [vmem:[#allocation2 + $0xe8] sm:$0xff]
      %v353 = vld [vmem:[#allocation2 + $0xf0] sm:$0xff]
      %v354 = vld [vmem:[#allocation2 + $0xf8] sm:$0xff]
      %v355 = vld [vmem:[%s256] sm:$0xff]
      %v356 = vld [vmem:[%s256 + $0x8] sm:$0xff]
      %v357 = vld [vmem:[%s256 + $0x10] sm:$0xff]
      %v358 = vld [vmem:[%s256 + $0x18] sm:$0xff]
      %v359 = vld [vmem:[%s256 + $0x20] sm:$0xff]
      %v360 = vld [vmem:[%s256 + $0x28] sm:$0xff]
      %v361 = vld [vmem:[%s256 + $0x30] sm:$0xff]
      %v362 = vld [vmem:[%s256 + $0x38] sm:$0xff]
      %v363 = vld [vmem:[%s256 + $0x40] sm:$0xff]
      %v364 = vld [vmem:[%s256 + $0x48] sm:$0xff]
      %v365 = vld [vmem:[%s256 + $0x50] sm:$0xff]
      %v366 = vld [vmem:[%s256 + $0x58] sm:$0xff]
      %v367 = vld [vmem:[%s256 + $0x60] sm:$0xff]
      %v368 = vld [vmem:[%s256 + $0x68] sm:$0xff]
      %v369 = vld [vmem:[%s256 + $0x70] sm:$0xff]
      %v370 = vld [vmem:[%s256 + $0x78] sm:$0xff]
      %v371 = vld [vmem:[%s256 + $0x80] sm:$0xff]
      %v372 = vld [vmem:[%s256 + $0x88] sm:$0xff]
      %v373 = vld [vmem:[%s256 + $0x90] sm:$0xff]
      %v374 = vld [vmem:[%s256 + $0x98] sm:$0xff]
      %v375 = vld [vmem:[%s256 + $0xa0] sm:$0xff]
      %v376 = vld [vmem:[%s256 + $0xa8] sm:$0xff]
      %v377 = vld [vmem:[%s256 + $0xb0] sm:$0xff]
      %v378 = vld [vmem:[%s256 + $0xb8] sm:$0xff]
      %v379 = vld [vmem:[%s256 + $0xc0] sm:$0xff]
      %v380 = vld [vmem:[%s256 + $0xc8] sm:$0xff]
      %v381 = vld [vmem:[%s256 + $0xd0] sm:$0xff]
      %v382 = vld [vmem:[%s256 + $0xd8] sm:$0xff]
      %v383 = vld [vmem:[%s256 + $0xe0] sm:$0xff]
      %v384 = vld [vmem:[%s256 + $0xe8] sm:$0xff]
      %v385 = vld [vmem:[%s256 + $0xf0] sm:$0xff]
      %v386 = vld [vmem:[%s256 + $0xf8] sm:$0xff]
      %v387 = vld [vmem:[%s266] sm:$0xf]
      %v388 = vld [vmem:[%s266 + $0x4] sm:$0xf]
      %v389 = vld [vmem:[%s266 + $0x8] sm:$0xf]
      %v390 = vld [vmem:[%s266 + $0xc] sm:$0xf]
      %v391 = vld [vmem:[%s266 + $0x10] sm:$0xf]
      %v392 = vld [vmem:[%s266 + $0x14] sm:$0xf]
      %v393 = vld [vmem:[%s266 + $0x18] sm:$0xf]
      %v394 = vld [vmem:[%s266 + $0x1c] sm:$0xf]
      %v395 = vld [vmem:[%s266 + $0x20] sm:$0xf]
      %v396 = vld [vmem:[%s266 + $0x24] sm:$0xf]
      %v397 = vld [vmem:[%s266 + $0x28] sm:$0xf]
      %v398 = vld [vmem:[%s266 + $0x2c] sm:$0xf]
      %v399 = vld [vmem:[%s266 + $0x30] sm:$0xf]
      %v400 = vld [vmem:[%s266 + $0x34] sm:$0xf]
      %v401 = vld [vmem:[%s266 + $0x38] sm:$0xf]
      %v402 = vld [vmem:[%s266 + $0x3c] sm:$0xf]
      %v403 = vld [vmem:[%s266 + $0x40] sm:$0xf]
      %v404 = vld [vmem:[%s266 + $0x44] sm:$0xf]
      %v405 = vld [vmem:[%s266 + $0x48] sm:$0xf]
      %v406 = vld [vmem:[%s266 + $0x4c] sm:$0xf]
      %v407 = vld [vmem:[%s266 + $0x50] sm:$0xf]
      %v408 = vld [vmem:[%s266 + $0x54] sm:$0xf]
      %v409 = vld [vmem:[%s266 + $0x58] sm:$0xf]
      %v410 = vld [vmem:[%s266 + $0x5c] sm:$0xf]
      %v411 = vld [vmem:[%s266 + $0x60] sm:$0xf]
      %v412 = vld [vmem:[%s266 + $0x64] sm:$0xf]
      %v413 = vld [vmem:[%s266 + $0x68] sm:$0xf]
      %v414 = vld [vmem:[%s266 + $0x6c] sm:$0xf]
      %v415 = vld [vmem:[%s266 + $0x70] sm:$0xf]
      %v416 = vld [vmem:[%s266 + $0x74] sm:$0xf]
      %v417 = vld [vmem:[%s266 + $0x78] sm:$0xf]
      %v418 = vld [vmem:[%s266 + $0x7c] sm:$0xf]
      %v451 = vunpack.c.l.b16 %v355
      %v452 = vunpack.c.h.b16 %v355
      %v453 = vunpack.c.l.b16 %v356
      %v454 = vunpack.c.h.b16 %v356
      %v455 = vunpack.c.l.b16 %v357
      %v456 = vunpack.c.h.b16 %v357
      %v457 = vunpack.c.l.b16 %v358
      %v458 = vunpack.c.h.b16 %v358
      %v459 = vunpack.c.l.b16 %v359
      %v460 = vunpack.c.h.b16 %v359
      %v461 = vunpack.c.l.b16 %v360
      %v462 = vunpack.c.h.b16 %v360
      %v463 = vunpack.c.l.b16 %v361
      %v464 = vunpack.c.h.b16 %v361
      %v465 = vunpack.c.l.b16 %v362
      %v466 = vunpack.c.h.b16 %v362
      %v467 = vunpack.c.l.b16 %v363
      %v468 = vunpack.c.h.b16 %v363
      %v469 = vunpack.c.l.b16 %v364
      %v470 = vunpack.c.h.b16 %v364
      %v471 = vunpack.c.l.b16 %v365
      %v472 = vunpack.c.h.b16 %v365
      %v473 = vunpack.c.l.b16 %v366
      %v474 = vunpack.c.h.b16 %v366
      %v475 = vunpack.c.l.b16 %v367
      %v476 = vunpack.c.h.b16 %v367
      %v477 = vunpack.c.l.b16 %v368
      %v478 = vunpack.c.h.b16 %v368
      %v479 = vunpack.c.l.b16 %v369
      %v480 = vunpack.c.h.b16 %v369
      %v481 = vunpack.c.l.b16 %v370
      %v482 = vunpack.c.h.b16 %v370
      %v483 = vunpack.c.l.b16 %v371
      %v484 = vunpack.c.h.b16 %v371
      %v485 = vunpack.c.l.b16 %v372
      %v486 = vunpack.c.h.b16 %v372
      %v487 = vunpack.c.l.b16 %v373
      %v488 = vunpack.c.h.b16 %v373
      %v489 = vunpack.c.l.b16 %v374
      %v490 = vunpack.c.h.b16 %v374
      %v491 = vunpack.c.l.b16 %v375
      %v492 = vunpack.c.h.b16 %v375
      %v493 = vunpack.c.l.b16 %v376
      %v494 = vunpack.c.h.b16 %v376
      %v495 = vunpack.c.l.b16 %v377
      %v496 = vunpack.c.h.b16 %v377
      %v497 = vunpack.c.l.b16 %v378
      %v498 = vunpack.c.h.b16 %v378
      %v499 = vunpack.c.l.b16 %v379
      %v500 = vunpack.c.h.b16 %v379
      %v501 = vunpack.c.l.b16 %v380
      %v502 = vunpack.c.h.b16 %v380
      %v503 = vunpack.c.l.b16 %v381
      %v504 = vunpack.c.h.b16 %v381
      %v505 = vunpack.c.l.b16 %v382
      %v506 = vunpack.c.h.b16 %v382
      %v507 = vunpack.c.l.b16 %v383
      %v508 = vunpack.c.h.b16 %v383
      %v509 = vunpack.c.l.b16 %v384
      %v510 = vunpack.c.h.b16 %v384
      %v511 = vunpack.c.l.b16 %v385
      %v512 = vunpack.c.h.b16 %v385
      %v513 = vunpack.c.l.b16 %v386
      %v514 = vunpack.c.h.b16 %v386
      %v515 = vpack.c.b16 %v453, %v451
      %v516 = vpack.c.b16 %v454, %v452
      %v517 = vpack.c.b16 %v457, %v455
      %v518 = vpack.c.b16 %v458, %v456
      %v519 = vpack.c.b16 %v461, %v459
      %v520 = vpack.c.b16 %v462, %v460
      %v521 = vpack.c.b16 %v465, %v463
      %v522 = vpack.c.b16 %v466, %v464
      %v523 = vpack.c.b16 %v469, %v467
      %v524 = vpack.c.b16 %v470, %v468
      %v525 = vpack.c.b16 %v473, %v471
      %v526 = vpack.c.b16 %v474, %v472
      %v527 = vpack.c.b16 %v477, %v475
      %v528 = vpack.c.b16 %v478, %v476
      %v529 = vpack.c.b16 %v481, %v479
      %v530 = vpack.c.b16 %v482, %v480
      %v531 = vpack.c.b16 %v485, %v483
      %v532 = vpack.c.b16 %v486, %v484
      %v533 = vpack.c.b16 %v489, %v487
      %v534 = vpack.c.b16 %v490, %v488
      %v535 = vpack.c.b16 %v493, %v491
      %v536 = vpack.c.b16 %v494, %v492
      %v537 = vpack.c.b16 %v497, %v495
      %v538 = vpack.c.b16 %v498, %v496
      %v539 = vpack.c.b16 %v501, %v499
      %v540 = vpack.c.b16 %v502, %v500
      %v541 = vpack.c.b16 %v505, %v503
      %v542 = vpack.c.b16 %v506, %v504
      %v543 = vpack.c.b16 %v509, %v507
      %v544 = vpack.c.b16 %v510, %v508
      %v545 = vpack.c.b16 %v513, %v511
      %v546 = vpack.c.b16 %v514, %v512
      %v611 = vunpack.c.l.b16 %v387
      %v612 = vunpack.c.l.b16 %v388
      %v613 = vunpack.c.l.b16 %v389
      %v614 = vunpack.c.l.b16 %v390
      %v615 = vunpack.c.l.b16 %v391
      %v616 = vunpack.c.l.b16 %v392
      %v617 = vunpack.c.l.b16 %v393
      %v618 = vunpack.c.l.b16 %v394
      %v619 = vunpack.c.l.b16 %v395
      %v620 = vunpack.c.l.b16 %v396
      %v621 = vunpack.c.l.b16 %v397
      %v622 = vunpack.c.l.b16 %v398
      %v623 = vunpack.c.l.b16 %v399
      %v624 = vunpack.c.l.b16 %v400
      %v625 = vunpack.c.l.b16 %v401
      %v626 = vunpack.c.l.b16 %v402
      %v627 = vunpack.c.l.b16 %v403
      %v628 = vunpack.c.l.b16 %v404
      %v629 = vunpack.c.l.b16 %v405
      %v630 = vunpack.c.l.b16 %v406
      %v631 = vunpack.c.l.b16 %v407
      %v632 = vunpack.c.l.b16 %v408
      %v633 = vunpack.c.l.b16 %v409
      %v634 = vunpack.c.l.b16 %v410
      %v635 = vunpack.c.l.b16 %v411
      %v636 = vunpack.c.l.b16 %v412
      %v637 = vunpack.c.l.b16 %v413
      %v638 = vunpack.c.l.b16 %v414
      %v639 = vunpack.c.l.b16 %v415
      %v640 = vunpack.c.l.b16 %v416
      %v641 = vunpack.c.l.b16 %v417
      %v642 = vunpack.c.l.b16 %v418
      %v643 = vpack.c.b16 %v612, %v611
      %v644 = vpack.c.b16 %v614, %v613
      %v645 = vpack.c.b16 %v616, %v615
      %v646 = vpack.c.b16 %v618, %v617
      %v647 = vpack.c.b16 %v620, %v619
      %v648 = vpack.c.b16 %v622, %v621
      %v649 = vpack.c.b16 %v624, %v623
      %v650 = vpack.c.b16 %v626, %v625
      %v651 = vpack.c.b16 %v628, %v627
      %v652 = vpack.c.b16 %v630, %v629
      %v653 = vpack.c.b16 %v632, %v631
      %v654 = vpack.c.b16 %v634, %v633
      %v655 = vpack.c.b16 %v636, %v635
      %v656 = vpack.c.b16 %v638, %v637
      %v657 = vpack.c.b16 %v640, %v639
      %v658 = vpack.c.b16 %v642, %v641
      %675 = vmatprep.subr.bf16.mxu0 0
      %676 = vmatpush1.bf16.msra.mxu0 %v643
      %677 = vmatprep.subr.bf16.mxu0 0
      %678 = vmatpush1.bf16.msra.mxu0 %v644
      %679 = vmatprep.subr.bf16.mxu0 0
      %680 = vmatpush1.bf16.msra.mxu0 %v645
      %681 = vmatprep.subr.bf16.mxu0 0
      %682 = vmatpush1.bf16.msra.mxu0 %v646
      %683 = vmatprep.subr.bf16.mxu0 0
      %684 = vmatpush1.bf16.msra.mxu0 %v647
      %685 = vmatprep.subr.bf16.mxu0 0
      %686 = vmatpush1.bf16.msra.mxu0 %v648
      %687 = vmatprep.subr.bf16.mxu0 0
      %688 = vmatpush1.bf16.msra.mxu0 %v649
      %689 = vmatprep.subr.bf16.mxu0 0
      %690 = vmatpush1.bf16.msra.mxu0 %v650
      %691 = vmatprep.subr.bf16.mxu0 0
      %692 = vmatpush1.bf16.msra.mxu0 %v651
      %693 = vmatprep.subr.bf16.mxu0 0
      %694 = vmatpush1.bf16.msra.mxu0 %v652
      %695 = vmatprep.subr.bf16.mxu0 0
      %696 = vmatpush1.bf16.msra.mxu0 %v653
      %697 = vmatprep.subr.bf16.mxu0 0
      %698 = vmatpush1.bf16.msra.mxu0 %v654
      %699 = vmatprep.subr.bf16.mxu0 0
      %700 = vmatpush1.bf16.msra.mxu0 %v655
      %701 = vmatprep.subr.bf16.mxu0 0
      %702 = vmatpush1.bf16.msra.mxu0 %v656
      %703 = vmatprep.subr.bf16.mxu0 0
      %704 = vmatpush1.bf16.msra.mxu0 %v657
      %705 = vmatprep.subr.bf16.mxu0 0
      %706 = vmatpush1.bf16.msra.mxu0 %v658
      %707 = vmatprep.mubr.bf16.mxu0 %v516
      %708 = vmatmul.mubr.bf16.gmra.mrb[0].mxu0 %v515
      %v709 = vpop.f32.mrb[0].mxu0
      %v710 = vadd.f32 0.0, %v709
      %v711 = vpop.f32.mrb[0].mxu0
      %v712 = vpop.f32.mrb[0].mxu0
      %v713 = vadd.f32 0.0, %v712
      %v714 = vpop.f32.mrb[0].mxu0
      %715 = vmatprep.mubr.bf16.mxu0 %v518
      %716 = vmatmul.mubr.bf16.gmra.mrb[0].mxu0 %v517
      %v717 = vpop.f32.mrb[0].mxu0
      %v718 = vadd.f32 0.0, %v717
      %v719 = vpop.f32.mrb[0].mxu0
      %v720 = vpop.f32.mrb[0].mxu0
      %v721 = vadd.f32 0.0, %v720
      %v722 = vpop.f32.mrb[0].mxu0
      %723 = vmatprep.mubr.bf16.mxu0 %v520
      %724 = vmatmul.mubr.bf16.gmra.mrb[0].mxu0 %v519
      %v725 = vpop.f32.mrb[0].mxu0
      %v726 = vadd.f32 0.0, %v725
      %v727 = vpop.f32.mrb[0].mxu0
      %v728 = vpop.f32.mrb[0].mxu0
      %v729 = vadd.f32 0.0, %v728
      %v730 = vpop.f32.mrb[0].mxu0
      %731 = vmatprep.mubr.bf16.mxu0 %v522
      %732 = vmatmul.mubr.bf16.gmra.mrb[0].mxu0 %v521
      %v733 = vpop.f32.mrb[0].mxu0
      %v734 = vadd.f32 0.0, %v733
      %v735 = vpop.f32.mrb[0].mxu0
      %v736 = vpop.f32.mrb[0].mxu0
      %v737 = vadd.f32 0.0, %v736
      %v738 = vpop.f32.mrb[0].mxu0
      %739 = vmatprep.mubr.bf16.mxu0 %v524
      %740 = vmatmul.mubr.bf16.gmra.mrb[0].mxu0 %v523
      %v741 = vpop.f32.mrb[0].mxu0
      %v742 = vadd.f32 0.0, %v741
      %v743 = vpop.f32.mrb[0].mxu0
      %v744 = vpop.f32.mrb[0].mxu0
      %v745 = vadd.f32 0.0, %v744
      %v746 = vpop.f32.mrb[0].mxu0
      %747 = vmatprep.mubr.bf16.mxu0 %v526
      %748 = vmatmul.mubr.bf16.gmra.mrb[0].mxu0 %v525
      %v749 = vpop.f32.mrb[0].mxu0
      %v750 = vadd.f32 0.0, %v749
      %v751 = vpop.f32.mrb[0].mxu0
      %v752 = vpop.f32.mrb[0].mxu0
      %v753 = vadd.f32 0.0, %v752
      %v754 = vpop.f32.mrb[0].mxu0
      %755 = vmatprep.mubr.bf16.mxu0 %v528
      %756 = vmatmul.mubr.bf16.gmra.mrb[0].mxu0 %v527
      %v757 = vpop.f32.mrb[0].mxu0
      %v758 = vadd.f32 0.0, %v757
      %v759 = vpop.f32.mrb[0].mxu0
      %v760 = vpop.f32.mrb[0].mxu0
      %v761 = vadd.f32 0.0, %v760
      %v762 = vpop.f32.mrb[0].mxu0
      %763 = vmatprep.mubr.bf16.mxu0 %v530
      %764 = vmatmul.mubr.bf16.gmra.mrb[0].mxu0 %v529
      %v765 = vpop.f32.mrb[0].mxu0
      %v766 = vadd.f32 0.0, %v765
      %v767 = vpop.f32.mrb[0].mxu0
      %v768 = vpop.f32.mrb[0].mxu0
      %v769 = vadd.f32 0.0, %v768
      %v770 = vpop.f32.mrb[0].mxu0
      %771 = vmatprep.mubr.bf16.mxu0 %v532
      %772 = vmatmul.mubr.bf16.gmra.mrb[0].mxu0 %v531
      %v773 = vpop.f32.mrb[0].mxu0
      %v774 = vadd.f32 0.0, %v773
      %v775 = vpop.f32.mrb[0].mxu0
      %v776 = vpop.f32.mrb[0].mxu0
      %v777 = vadd.f32 0.0, %v776
      %v778 = vpop.f32.mrb[0].mxu0
      %779 = vmatprep.mubr.bf16.mxu0 %v534
      %780 = vmatmul.mubr.bf16.gmra.mrb[0].mxu0 %v533
      %v781 = vpop.f32.mrb[0].mxu0
      %v782 = vadd.f32 0.0, %v781
      %v783 = vpop.f32.mrb[0].mxu0
      %v784 = vpop.f32.mrb[0].mxu0
      %v785 = vadd.f32 0.0, %v784
      %v786 = vpop.f32.mrb[0].mxu0
      %787 = vmatprep.mubr.bf16.mxu0 %v536
      %788 = vmatmul.mubr.bf16.gmra.mrb[0].mxu0 %v535
      %v789 = vpop.f32.mrb[0].mxu0
      %v790 = vadd.f32 0.0, %v789
      %v791 = vpop.f32.mrb[0].mxu0
      %v792 = vpop.f32.mrb[0].mxu0
      %v793 = vadd.f32 0.0, %v792
      %v794 = vpop.f32.mrb[0].mxu0
      %795 = vmatprep.mubr.bf16.mxu0 %v538
      %796 = vmatmul.mubr.bf16.gmra.mrb[0].mxu0 %v537
      %v797 = vpop.f32.mrb[0].mxu0
      %v798 = vadd.f32 0.0, %v797
      %v799 = vpop.f32.mrb[0].mxu0
      %v800 = vpop.f32.mrb[0].mxu0
      %v801 = vadd.f32 0.0, %v800
      %v802 = vpop.f32.mrb[0].mxu0
      %803 = vmatprep.mubr.bf16.mxu0 %v540
      %804 = vmatmul.mubr.bf16.gmra.mrb[0].mxu0 %v539
      %v805 = vpop.f32.mrb[0].mxu0
      %v806 = vadd.f32 0.0, %v805
      %v807 = vpop.f32.mrb[0].mxu0
      %v808 = vpop.f32.mrb[0].mxu0
      %v809 = vadd.f32 0.0, %v808
      %v810 = vpop.f32.mrb[0].mxu0
      %811 = vmatprep.mubr.bf16.mxu0 %v542
      %812 = vmatmul.mubr.bf16.gmra.mrb[0].mxu0 %v541
      %v813 = vpop.f32.mrb[0].mxu0
      %v814 = vadd.f32 0.0, %v813
      %v815 = vpop.f32.mrb[0].mxu0
      %v816 = vpop.f32.mrb[0].mxu0
      %v817 = vadd.f32 0.0, %v816
      %v818 = vpop.f32.mrb[0].mxu0
      %819 = vmatprep.mubr.bf16.mxu0 %v544
      %820 = vmatmul.mubr.bf16.gmra.mrb[0].mxu0 %v543
      %v821 = vpop.f32.mrb[0].mxu0
      %v822 = vadd.f32 0.0, %v821
      %v823 = vpop.f32.mrb[0].mxu0
      %v824 = vpop.f32.mrb[0].mxu0
      %v825 = vadd.f32 0.0, %v824
      %v826 = vpop.f32.mrb[0].mxu0
      %827 = vmatprep.mubr.bf16.mxu0 %v546
      %828 = vmatmul.mubr.bf16.gmra.mrb[0].mxu0 %v545
      %v829 = vpop.f32.mrb[0].mxu0
      %v830 = vadd.f32 0.0, %v829
      %v831 = vpop.f32.mrb[0].mxu0
      %v832 = vpop.f32.mrb[0].mxu0
      %v833 = vadd.f32 0.0, %v832
      %v834 = vpop.f32.mrb[0].mxu0
      %835 = vdwg.mxu0
      %v836 = vadd.f32 %v323, %v710
      %v837 = vadd.f32 %v324, %v713
      %v838 = vadd.f32 %v325, %v718
      %v839 = vadd.f32 %v326, %v721
      %v840 = vadd.f32 %v327, %v726
      %v841 = vadd.f32 %v328, %v729
      %v842 = vadd.f32 %v329, %v734
      %v843 = vadd.f32 %v330, %v737
      %v844 = vadd.f32 %v331, %v742
      %v845 = vadd.f32 %v332, %v745
      %v846 = vadd.f32 %v333, %v750
      %v847 = vadd.f32 %v334, %v753
      %v848 = vadd.f32 %v335, %v758
      %v849 = vadd.f32 %v336, %v761
      %v850 = vadd.f32 %v337, %v766
      %v851 = vadd.f32 %v338, %v769
      %v852 = vadd.f32 %v339, %v774
      %v853 = vadd.f32 %v340, %v777
      %v854 = vadd.f32 %v341, %v782
      %v855 = vadd.f32 %v342, %v785
      %v856 = vadd.f32 %v343, %v790
      %v857 = vadd.f32 %v344, %v793
      %v858 = vadd.f32 %v345, %v798
      %v859 = vadd.f32 %v346, %v801
      %v860 = vadd.f32 %v347, %v806
      %v861 = vadd.f32 %v348, %v809
      %v862 = vadd.f32 %v349, %v814
      %v863 = vadd.f32 %v350, %v817
      %v864 = vadd.f32 %v351, %v822
      %v865 = vadd.f32 %v352, %v825
      %v866 = vadd.f32 %v353, %v830
      %v867 = vadd.f32 %v354, %v833
      %868 = vst [vmem:[#allocation2] sm:$0xff] %v836
      %869 = vst [vmem:[#allocation2 + $0x8] sm:$0xff] %v837
      %870 = vst [vmem:[#allocation2 + $0x10] sm:$0xff] %v838
      %871 = vst [vmem:[#allocation2 + $0x18] sm:$0xff] %v839
      %872 = vst [vmem:[#allocation2 + $0x20] sm:$0xff] %v840
      %873 = vst [vmem:[#allocation2 + $0x28] sm:$0xff] %v841
      %874 = vst [vmem:[#allocation2 + $0x30] sm:$0xff] %v842
      %875 = vst [vmem:[#allocation2 + $0x38] sm:$0xff] %v843
      %876 = vst [vmem:[#allocation2 + $0x40] sm:$0xff] %v844
      %877 = vst [vmem:[#allocation2 + $0x48] sm:$0xff] %v845
      %878 = vst [vmem:[#allocation2 + $0x50] sm:$0xff] %v846
      %879 = vst [vmem:[#allocation2 + $0x58] sm:$0xff] %v847
      %880 = vst [vmem:[#allocation2 + $0x60] sm:$0xff] %v848
      %881 = vst [vmem:[#allocation2 + $0x68] sm:$0xff] %v849
      %882 = vst [vmem:[#allocation2 + $0x70] sm:$0xff] %v850
      %883 = vst [vmem:[#allocation2 + $0x78] sm:$0xff] %v851
      %884 = vst [vmem:[#allocation2 + $0x80] sm:$0xff] %v852
      %885 = vst [vmem:[#allocation2 + $0x88] sm:$0xff] %v853
      %886 = vst [vmem:[#allocation2 + $0x90] sm:$0xff] %v854
      %887 = vst [vmem:[#allocation2 + $0x98] sm:$0xff] %v855
      %888 = vst [vmem:[#allocation2 + $0xa0] sm:$0xff] %v856
      %889 = vst [vmem:[#allocation2 + $0xa8] sm:$0xff] %v857
      %890 = vst [vmem:[#allocation2 + $0xb0] sm:$0xff] %v858
      %891 = vst [vmem:[#allocation2 + $0xb8] sm:$0xff] %v859
      %892 = vst [vmem:[#allocation2 + $0xc0] sm:$0xff] %v860
      %893 = vst [vmem:[#allocation2 + $0xc8] sm:$0xff] %v861
      %894 = vst [vmem:[#allocation2 + $0xd0] sm:$0xff] %v862
      %895 = vst [vmem:[#allocation2 + $0xd8] sm:$0xff] %v863
      %896 = vst [vmem:[#allocation2 + $0xe0] sm:$0xff] %v864
      %897 = vst [vmem:[#allocation2 + $0xe8] sm:$0xff] %v865
      %898 = vst [vmem:[#allocation2 + $0xf0] sm:$0xff] %v866
      %899 = vst [vmem:[#allocation2 + $0xf8] sm:$0xff] %v867
      // Predicated region
      $region37: #{basic_block_forward.5} parent=31 // pred_check
        %p900 = pneg %p287
      $region38: #{basic_block_forward.5} parent=31 // pred_check_branch
        %902 = sbr.rel (%p900) target = $region40
      $region39: #{basic_block_forward.5} parent=31 // pred_region
        %v903 = vld [vmem:[#allocation2] sm:$0xff]
        %v904 = vld [vmem:[#allocation2 + $0x8] sm:$0xff]
        %v905 = vld [vmem:[#allocation2 + $0x10] sm:$0xff]
        %v906 = vld [vmem:[#allocation2 + $0x18] sm:$0xff]
        %v907 = vld [vmem:[#allocation2 + $0x20] sm:$0xff]
        %v908 = vld [vmem:[#allocation2 + $0x28] sm:$0xff]
        %v909 = vld [vmem:[#allocation2 + $0x30] sm:$0xff]
        %v910 = vld [vmem:[#allocation2 + $0x38] sm:$0xff]
        %v911 = vld [vmem:[#allocation2 + $0x40] sm:$0xff]
        %v912 = vld [vmem:[#allocation2 + $0x48] sm:$0xff]
        %v913 = vld [vmem:[#allocation2 + $0x50] sm:$0xff]
        %v914 = vld [vmem:[#allocation2 + $0x58] sm:$0xff]
        %v915 = vld [vmem:[#allocation2 + $0x60] sm:$0xff]
        %v916 = vld [vmem:[#allocation2 + $0x68] sm:$0xff]
        %v917 = vld [vmem:[#allocation2 + $0x70] sm:$0xff]
        %v918 = vld [vmem:[#allocation2 + $0x78] sm:$0xff]
        %v919 = vld [vmem:[#allocation2 + $0x80] sm:$0xff]
        %v920 = vld [vmem:[#allocation2 + $0x88] sm:$0xff]
        %v921 = vld [vmem:[#allocation2 + $0x90] sm:$0xff]
        %v922 = vld [vmem:[#allocation2 + $0x98] sm:$0xff]
        %v923 = vld [vmem:[#allocation2 + $0xa0] sm:$0xff]
        %v924 = vld [vmem:[#allocation2 + $0xa8] sm:$0xff]
        %v925 = vld [vmem:[#allocation2 + $0xb0] sm:$0xff]
        %v926 = vld [vmem:[#allocation2 + $0xb8] sm:$0xff]
        %v927 = vld [vmem:[#allocation2 + $0xc0] sm:$0xff]
        %v928 = vld [vmem:[#allocation2 + $0xc8] sm:$0xff]
        %v929 = vld [vmem:[#allocation2 + $0xd0] sm:$0xff]
        %v930 = vld [vmem:[#allocation2 + $0xd8] sm:$0xff]
        %v931 = vld [vmem:[#allocation2 + $0xe0] sm:$0xff]
        %v932 = vld [vmem:[#allocation2 + $0xe8] sm:$0xff]
        %v933 = vld [vmem:[#allocation2 + $0xf0] sm:$0xff]
        %v934 = vld [vmem:[#allocation2 + $0xf8] sm:$0xff]
        %v935 = vld [vmem:[%s275] sm:$0xff]
        %v936 = vld [vmem:[%s275 + $0x8] sm:$0xff]
        %v937 = vld [vmem:[%s275 + $0x10] sm:$0xff]
        %v938 = vld [vmem:[%s275 + $0x18] sm:$0xff]
        %v939 = vld [vmem:[%s275 + $0x20] sm:$0xff]
        %v940 = vld [vmem:[%s275 + $0x28] sm:$0xff]
        %v941 = vld [vmem:[%s275 + $0x30] sm:$0xff]
        %v942 = vld [vmem:[%s275 + $0x38] sm:$0xff]
        %v943 = vld [vmem:[%s275 + $0x40] sm:$0xff]
        %v944 = vld [vmem:[%s275 + $0x48] sm:$0xff]
        %v945 = vld [vmem:[%s275 + $0x50] sm:$0xff]
        %v946 = vld [vmem:[%s275 + $0x58] sm:$0xff]
        %v947 = vld [vmem:[%s275 + $0x60] sm:$0xff]
        %v948 = vld [vmem:[%s275 + $0x68] sm:$0xff]
        %v949 = vld [vmem:[%s275 + $0x70] sm:$0xff]
        %v950 = vld [vmem:[%s275 + $0x78] sm:$0xff]
        %v951 = vld [vmem:[%s275 + $0x80] sm:$0xff]
        %v952 = vld [vmem:[%s275 + $0x88] sm:$0xff]
        %v953 = vld [vmem:[%s275 + $0x90] sm:$0xff]
        %v954 = vld [vmem:[%s275 + $0x98] sm:$0xff]
        %v955 = vld [vmem:[%s275 + $0xa0] sm:$0xff]
        %v956 = vld [vmem:[%s275 + $0xa8] sm:$0xff]
        %v957 = vld [vmem:[%s275 + $0xb0] sm:$0xff]
        %v958 = vld [vmem:[%s275 + $0xb8] sm:$0xff]
        %v959 = vld [vmem:[%s275 + $0xc0] sm:$0xff]
        %v960 = vld [vmem:[%s275 + $0xc8] sm:$0xff]
        %v961 = vld [vmem:[%s275 + $0xd0] sm:$0xff]
        %v962 = vld [vmem:[%s275 + $0xd8] sm:$0xff]
        %v963 = vld [vmem:[%s275 + $0xe0] sm:$0xff]
        %v964 = vld [vmem:[%s275 + $0xe8] sm:$0xff]
        %v965 = vld [vmem:[%s275 + $0xf0] sm:$0xff]
        %v966 = vld [vmem:[%s275 + $0xf8] sm:$0xff]
        %v967 = vadd.f32 %v903, %v935
        %v968 = vadd.f32 %v904, %v936
        %v969 = vadd.f32 %v905, %v937
        %v970 = vadd.f32 %v906, %v938
        %v971 = vadd.f32 %v907, %v939
        %v972 = vadd.f32 %v908, %v940
        %v973 = vadd.f32 %v909, %v941
        %v974 = vadd.f32 %v910, %v942
        %v975 = vadd.f32 %v911, %v943
        %v976 = vadd.f32 %v912, %v944
        %v977 = vadd.f32 %v913, %v945
        %v978 = vadd.f32 %v914, %v946
        %v979 = vadd.f32 %v915, %v947
        %v980 = vadd.f32 %v916, %v948
        %v981 = vadd.f32 %v917, %v949
        %v982 = vadd.f32 %v918, %v950
        %v983 = vadd.f32 %v919, %v951
        %v984 = vadd.f32 %v920, %v952
        %v985 = vadd.f32 %v921, %v953
        %v986 = vadd.f32 %v922, %v954
        %v987 = vadd.f32 %v923, %v955
        %v988 = vadd.f32 %v924, %v956
        %v989 = vadd.f32 %v925, %v957
        %v990 = vadd.f32 %v926, %v958
        %v991 = vadd.f32 %v927, %v959
        %v992 = vadd.f32 %v928, %v960
        %v993 = vadd.f32 %v929, %v961
        %v994 = vadd.f32 %v930, %v962
        %v995 = vadd.f32 %v931, %v963
        %v996 = vadd.f32 %v932, %v964
        %v997 = vadd.f32 %v933, %v965
        %v998 = vadd.f32 %v934, %v966
        %999 = vst [vmem:[%s284] sm:$0xff] %v967
        %1000 = vst [vmem:[%s284 + $0x8] sm:$0xff] %v968
        %1001 = vst [vmem:[%s284 + $0x10] sm:$0xff] %v969
        %1002 = vst [vmem:[%s284 + $0x18] sm:$0xff] %v970
        %1003 = vst [vmem:[%s284 + $0x20] sm:$0xff] %v971
        %1004 = vst [vmem:[%s284 + $0x28] sm:$0xff] %v972
        %1005 = vst [vmem:[%s284 + $0x30] sm:$0xff] %v973
        %1006 = vst [vmem:[%s284 + $0x38] sm:$0xff] %v974
        %1007 = vst [vmem:[%s284 + $0x40] sm:$0xff] %v975
        %1008 = vst [vmem:[%s284 + $0x48] sm:$0xff] %v976
        %1009 = vst [vmem:[%s284 + $0x50] sm:$0xff] %v977
        %1010 = vst [vmem:[%s284 + $0x58] sm:$0xff] %v978
        %1011 = vst [vmem:[%s284 + $0x60] sm:$0xff] %v979
        %1012 = vst [vmem:[%s284 + $0x68] sm:$0xff] %v980
        %1013 = vst [vmem:[%s284 + $0x70] sm:$0xff] %v981
        %1014 = vst [vmem:[%s284 + $0x78] sm:$0xff] %v982
        %1015 = vst [vmem:[%s284 + $0x80] sm:$0xff] %v983
        %1016 = vst [vmem:[%s284 + $0x88] sm:$0xff] %v984
        %1017 = vst [vmem:[%s284 + $0x90] sm:$0xff] %v985
        %1018 = vst [vmem:[%s284 + $0x98] sm:$0xff] %v986
        %1019 = vst [vmem:[%s284 + $0xa0] sm:$0xff] %v987
        %1020 = vst [vmem:[%s284 + $0xa8] sm:$0xff] %v988
        %1021 = vst [vmem:[%s284 + $0xb0] sm:$0xff] %v989
        %1022 = vst [vmem:[%s284 + $0xb8] sm:$0xff] %v990
        %1023 = vst [vmem:[%s284 + $0xc0] sm:$0xff] %v991
        %1024 = vst [vmem:[%s284 + $0xc8] sm:$0xff] %v992
        %1025 = vst [vmem:[%s284 + $0xd0] sm:$0xff] %v993
        %1026 = vst [vmem:[%s284 + $0xd8] sm:$0xff] %v994
        %1027 = vst [vmem:[%s284 + $0xe0] sm:$0xff] %v995
        %1028 = vst [vmem:[%s284 + $0xe8] sm:$0xff] %v996
        %1029 = vst [vmem:[%s284 + $0xf0] sm:$0xff] %v997
        %1030 = vst [vmem:[%s284 + $0xf8] sm:$0xff] %v998
      $region40: #{basic_block_forward.5} parent=31 // pred_fallthru
        _
      %s1031 = smul.u32 32, %s19
      %p1032 = scmp.lt.s32.totalorder %s1031, 63
      %s1033 = scalar_select %p1032, %s1031, 63
      %p1034 = scmp.lt.s32.totalorder %s20, 0
      %s1035 = scalar_select %p1034, %s20, 0
      %s1036 = sadd.s32 %s1035, %s1033
      %s1037 = smul.addr %s1036, 8
      %s1038 = scalar_lea.vmem %s3, %s1037
      // Predicated region
      $region41: #{basic_block_forward.5} parent=31 // pred_check
        %p1039 = pneg %p137
      $region42: #{basic_block_forward.5} parent=31 // pred_check_branch
        %1041 = sbr.rel (%p1039) target = $region44
      $region43: #{basic_block_forward.5} parent=31 // pred_region
        %s1042 = smul.u32 32, %s19
      $region44: #{basic_block_forward.5} parent=31 // pred_fallthru
        _
    $region32: #{basic_block_forward.5} parent=5 // pred_fallthru
      _
    %p1043 = scmp.le.s32.totalorder 2, %s9
    // Predicated region
    $region45: #{basic_block_forward.5} parent=5 // pred_check
      %p1044 = pneg %p1043
    $region46: #{basic_block_forward.5} parent=5 // pred_check_branch
      %1046 = sbr.rel (%p1044) target = $region48
    $region47: #{basic_block_forward.5} parent=5 // pred_region
      %s1047 = ssub.s32 %s9, 2
      // Predicated region
      $region49: #{basic_block_forward.5} parent=47 // pred_check
        %p1048 = pneg %p143
      $region50: #{basic_block_forward.5} parent=47 // pred_check_branch
        %1050 = sbr.rel (%p1048) target = $region52
      $region51: #{basic_block_forward.5} parent=47 // pred_region
        %s1051 = smul.u32 32, %s22
        %p1052 = scmp.lt.s32.totalorder %s1051, 63
        %s1053 = scalar_select %p1052, %s1051, 63
        %p1054 = scmp.lt.s32.totalorder %s23, 0
        %s1055 = scalar_select %p1054, %s23, 0
        %s1056 = sadd.s32 %s1055, %s1053
        %s1057 = smul.addr %s1056, 8
        %s1058 = scalar_lea.vmem %s3, %s1057
      $region52: #{basic_block_forward.5} parent=47 // pred_fallthru
        _
    $region48: #{basic_block_forward.5} parent=5 // pred_fallthru
      _
  $region6: #{basic_block_forward.5} parent=0 // loop_footer
    %s13 = sadd.s32 1, %s9
  $region7: #{basic_block_forward.5} parent=0 // loop_footer_branch
    %8 = sbr.rel target = $region3
  $region8: #{basic_block_forward.5} parent=0 // loop_exit
    _

</llo_original>
